<compile_context>
chip_gen: v7x
topology: tpu7x:2x2x1
jax: 0.10.0
libtpu: 0.0.40
codegen_flags: <defaults>
</compile_context>

<pallas_src>
import jax
import jax.numpy as jnp
from jax.experimental import pallas as pl
from jax.experimental.pallas import tpu as pltpu


def _round_up(x, m):
    return ((x + m - 1) // m) * m


def _pick_tile(dim_padded, target, granule):
    """Largest tile <= target (multiple of `granule`) whose tile-multiple
    padding of `dim_padded` wastes at most ~6.25% (padding == wasted HBM BW)."""
    target = max(granule, (target // granule) * granule)
    if dim_padded <= target:
        return dim_padded                     # single block, zero extra waste
    for cand in range(target, granule - 1, -granule):
        waste = (-dim_padded) % cand
        if waste * 16 <= dim_padded:
            return cand
    return granule                            # granule always divides exactly


def _matmul_sigmoid_kernel(x_ref, p_ref, o_ref):
    # x_ref: (tm, K) f32   p_ref: (K, tn) f32   o_ref: (tm, tn) f32
    # sigmoid is applied to the small resident P tile (EUP work, free under a
    # memory-bound regime); full K stays in-block so accumulation is exact.
    o_ref[...] = jnp.dot(
        x_ref[...],
        jax.nn.sigmoid(p_ref[...]),
        preferred_element_type=jnp.float32,
        precision=jax.lax.Precision.HIGHEST,
    )


def _sig_matmul(x, p, *, tm_target=512, tn_target=2048):
    """Pallas computation of `x @ sigmoid(p)` for x:(M,K), p:(K,N) -> (M,N) f32."""
    M, K = x.shape
    Kp, N = p.shape
    assert K == Kp, "contraction (n_types) mismatch"
    if M == 0 or N == 0 or K == 0:
        # TODO(synk): degenerate zero-size dims handled outside Pallas.
        return jnp.zeros((M, N), jnp.float32)

    # --- minimal hardware-granularity padding, then waste-capped tiles ------
    M8 = _round_up(M, 8)            # sublane granularity
    N128 = _round_up(N, 128)        # lane granularity
    tm = _pick_tile(M8, tm_target, 8)
    tn = _pick_tile(N128, tn_target, 128)
    M_pad = _round_up(M8, tm)
    N_pad = _round_up(N128, tn)

    # v7x megacore: avoid a degenerate (1, 1) grid when rows can split cheaply.
    if M_pad // tm == 1 and N_pad // tn == 1 and M_pad >= 16 and M_pad % 16 == 0:
        tm = M_pad // 2

    if (M_pad, K) != x.shape:
        x = jnp.pad(x, ((0, M_pad - M), (0, 0)))
    if (K, N_pad) != p.shape:
        p = jnp.pad(p, ((0, 0), (0, N_pad - N)))

    # Row tiles innermost (fastest varying) -> the (K, tn) P block index stays
    # constant across consecutive steps, so Pallas skips its re-DMA and only
    # the small (tm, K) X tile streams per step.
    grid = (N_pad // tn, M_pad // tm)

    out = pl.pallas_call(
        _matmul_sigmoid_kernel,
        out_shape=jax.ShapeDtypeStruct((M_pad, N_pad), jnp.float32),
        grid_spec=pltpu.PrefetchScalarGridSpec(
            num_scalar_prefetch=0,
            grid=grid,
            in_specs=[
                pl.BlockSpec((tm, K), lambda j, i: (i, 0)),   # X row tile
                pl.BlockSpec((K, tn), lambda j, i: (0, j)),   # P col tile (resident over i)
            ],
            out_specs=pl.BlockSpec((tm, tn), lambda j, i: (i, j)),
        ),
        compiler_params=pltpu.CompilerParams(
            dimension_semantics=("parallel", "parallel")),
    )(x, p)

    if (M_pad, N_pad) != (M, N):
        out = out[:M, :N]
    return out


def spotlight_forward(Q, S, P, *, tm=512, tn_cap=2048):
    """Mirror of SPOTlightConstrained.forward: (Q @ sigmoid(P), S @ sigmoid(P))."""
    Qf = Q.astype(jnp.float32)
    Sf = S.astype(jnp.float32)
    Pf = P.astype(jnp.float32)
    reconst = _sig_matmul(Qf, Pf, tm_target=tm, tn_target=tn_cap)
    ilastik = _sig_matmul(Sf, Pf, tm_target=tm, tn_target=tn_cap)
    return reconst, ilastik


if __name__ == "__main__":
    # Small shapes consistent with the module.
    n_types = 32      # contraction dim (columns of Q/S, rows of P)
    n_spots = 256     # output columns
    n_genes = 128     # rows of Q
    n_pixels = 64     # rows of S

    key = jax.random.PRNGKey(0)
    kp, kq, ks = jax.random.split(key, 3)

    # Deterministic parameter init (matches torch.rand: uniform [0, 1)).
    P = jax.random.uniform(kp, (n_types, n_spots), dtype=jnp.float32)
    Q = jax.random.normal(kq, (n_genes, n_types), dtype=jnp.float32)
    S = jax.random.normal(ks, (n_pixels, n_types), dtype=jnp.float32)

    reconst, ilastik = jax.jit(spotlight_forward)(Q, S, P)
    jax.block_until_ready((reconst, ilastik))

    # Pure-JAX reference check (full-precision f32 matmul).
    p_sig = jax.nn.sigmoid(P)
    ref_reconst = jnp.dot(Q, p_sig, precision=jax.lax.Precision.HIGHEST)
    ref_ilastik = jnp.dot(S, p_sig, precision=jax.lax.Precision.HIGHEST)
    assert reconst.shape == (n_genes, n_spots)
    assert ilastik.shape == (n_pixels, n_spots)
    assert jnp.allclose(reconst, ref_reconst, atol=1e-4, rtol=1e-4)
    assert jnp.allclose(ilastik, ref_ilastik, atol=1e-4, rtol=1e-4)

    print("KERNEL_OK")
</pallas_src>

<mosaic_0001>
module attributes {stable_mosaic.version = 11 : i64} {
  func.func @_matmul_sigmoid_kernel(%arg0: i32, %arg1: i32, %arg2: memref<32x32xf32, #tpu.memory_space<vmem>>, %arg3: memref<32x256xf32, #tpu.memory_space<vmem>>, %arg4: memref<32x256xf32, #tpu.memory_space<vmem>>) attributes {dimension_semantics = [#tpu.dimension_semantics<parallel>, #tpu.dimension_semantics<parallel>], iteration_bounds = array<i64: 1, 2>, scalar_prefetch = 0 : i64, scratch_operands = 0 : i64, tpu.core_type = #tpu.core_type<tc>, window_params = [{transform_indices = @transform_0, window_bounds = array<i64: 32, 32>}, {transform_indices = @transform_1, window_bounds = array<i64: 32, 256>}, {transform_indices = @transform_2, window_bounds = array<i64: 32, 256>}]} {
    %c0 = arith.constant 0 : index
    %c0_0 = arith.constant 0 : index
    %0 = vector.load %arg2[%c0, %c0_0] : memref<32x32xf32, #tpu.memory_space<vmem>>, vector<32x32xf32>
    %c0_1 = arith.constant 0 : index
    %c0_2 = arith.constant 0 : index
    %1 = vector.load %arg3[%c0_1, %c0_2] : memref<32x256xf32, #tpu.memory_space<vmem>>, vector<32x256xf32>
    %2 = arith.negf %1 : vector<32x256xf32>
    %3 = math.exp %2 : vector<32x256xf32>
    %cst = arith.constant 1.000000e+00 : f32
    %4 = vector.broadcast %cst : f32 to vector<32x256xf32>
    %5 = arith.addf %4, %3 : vector<32x256xf32>
    %6 = arith.divf %4, %5 : vector<32x256xf32>
    %cst_3 = arith.constant dense<0.000000e+00> : vector<32x256xf32>
    %7 = tpu.matmul %0, %6, %cst_3 {dimension_numbers = #tpu.dot_dimension_numbers<[1], [0], [0], [1], [0, 0, 1, 1], [], []>, precision = #tpu.contract_precision<fp32>} : vector<32x32xf32>, vector<32x256xf32>, vector<32x256xf32> -> vector<32x256xf32>
    %c0_4 = arith.constant 0 : index
    %c0_5 = arith.constant 0 : index
    %8 = vector.load %arg4[%c0_4, %c0_5] : memref<32x256xf32, #tpu.memory_space<vmem>>, vector<32x256xf32>
    tpu.vector_store %arg4[%c0_4, %c0_5], %7 {strides = array<i32>} : memref<32x256xf32, #tpu.memory_space<vmem>>, vector<32x256xf32>,
    return
  }
  func.func @transform_0(%arg0: i32, %arg1: i32) -> (i32, i32) {
    %c0_i32 = arith.constant 0 : i32
    %c0_i32_0 = arith.constant 0 : i32
    return %arg1, %c0_i32 : i32, i32
  }
  func.func @transform_1(%arg0: i32, %arg1: i32) -> (i32, i32) {
    %c0_i32 = arith.constant 0 : i32
    %c0_i32_0 = arith.constant 0 : i32
    return %c0_i32, %arg0 : i32, i32
  }
  func.func @transform_2(%arg0: i32, %arg1: i32) -> (i32, i32) {
    %c0_i32 = arith.constant 0 : i32
    return %arg1, %arg0 : i32, i32
  }
}

module attributes {stable_mosaic.version = 11 : i64} {
  func.func @_matmul_sigmoid_kernel(%arg0: i32, %arg1: i32, %arg2: memref<64x32xf32, #tpu.memory_space<vmem>>, %arg3: memref<32x256xf32, #tpu.memory_space<vmem>>, %arg4: memref<64x256xf32, #tpu.memory_space<vmem>>) attributes {dimension_semantics = [#tpu.dimension_semantics<parallel>, #tpu.dimension_semantics<parallel>], iteration_bounds = array<i64: 1, 2>, scalar_prefetch = 0 : i64, scratch_operands = 0 : i64, tpu.core_type = #tpu.core_type<tc>, window_params = [{transform_indices = @transform_0, window_bounds = array<i64: 64, 32>}, {transform_indices = @transform_1, window_bounds = array<i64: 32, 256>}, {transform_indices = @transform_2, window_bounds = array<i64: 64, 256>}]} {
    %c0 = arith.constant 0 : index
    %c0_0 = arith.constant 0 : index
    %0 = vector.load %arg2[%c0, %c0_0] : memref<64x32xf32, #tpu.memory_space<vmem>>, vector<64x32xf32>
    %c0_1 = arith.constant 0 : index
    %c0_2 = arith.constant 0 : index
    %1 = vector.load %arg3[%c0_1, %c0_2] : memref<32x256xf32, #tpu.memory_space<vmem>>, vector<32x256xf32>
    %2 = arith.negf %1 : vector<32x256xf32>
    %3 = math.exp %2 : vector<32x256xf32>
    %cst = arith.constant 1.000000e+00 : f32
    %4 = vector.broadcast %cst : f32 to vector<32x256xf32>
    %5 = arith.addf %4, %3 : vector<32x256xf32>
    %6 = arith.divf %4, %5 : vector<32x256xf32>
    %cst_3 = arith.constant dense<0.000000e+00> : vector<64x256xf32>
    %7 = tpu.matmul %0, %6, %cst_3 {dimension_numbers = #tpu.dot_dimension_numbers<[1], [0], [0], [1], [0, 0, 1, 1], [], []>, precision = #tpu.contract_precision<fp32>} : vector<64x32xf32>, vector<32x256xf32>, vector<64x256xf32> -> vector<64x256xf32>
    %c0_4 = arith.constant 0 : index
    %c0_5 = arith.constant 0 : index
    %8 = vector.load %arg4[%c0_4, %c0_5] : memref<64x256xf32, #tpu.memory_space<vmem>>, vector<64x256xf32>
    tpu.vector_store %arg4[%c0_4, %c0_5], %7 {strides = array<i32>} : memref<64x256xf32, #tpu.memory_space<vmem>>, vector<64x256xf32>,
    return
  }
  func.func @transform_0(%arg0: i32, %arg1: i32) -> (i32, i32) {
    %c0_i32 = arith.constant 0 : i32
    %c0_i32_0 = arith.constant 0 : i32
    return %arg1, %c0_i32 : i32, i32
  }
  func.func @transform_1(%arg0: i32, %arg1: i32) -> (i32, i32) {
    %c0_i32 = arith.constant 0 : i32
    %c0_i32_0 = arith.constant 0 : i32
    return %c0_i32, %arg0 : i32, i32
  }
  func.func @transform_2(%arg0: i32, %arg1: i32) -> (i32, i32) {
    %c0_i32 = arith.constant 0 : i32
    return %arg1, %arg0 : i32, i32
  }
}

</mosaic_0001>

<llo_original>
// kernel: spotlight_forward.3
$region0: #{spotlight_forward.3}
  #allocation0 [shape = 'u32[]', space=smem, size = 0x4, offset = 0x4, fixed_abs, tag = 'smem constant byte address 0x4 - core index']
  #allocation1 [shape = 'u32[144,128]{1,0:T(1,128)}', space=vmem, size = 0x12000, scoped, tag = 'internal scratch']
  %s0 = inlined_call_operand.vmem [shape: f32[64,32], index: 0, kind: input, shape index: {}]
  %s1 = inlined_call_operand.vmem [shape: f32[32,256], index: 1, kind: input, shape index: {}]
  %s2 = inlined_call_operand.hbm [shape: f32[64,256], index: 2, kind: output, shape index: {}]
  %s3 = sld [smem:[#allocation0]]
  $region41: #{spotlight_forward.3} parent=0
    _
  %s5 = ssub.s32 1, %s3
  %s6 = scalar_select 0, %s5, %s3
  $region1: #{spotlight_forward.3} parent=0
    #allocation2 [shape = 'u8[65536]{0}', space=vmem, size = 0x10000, scoped, tag = 'output window, operand 0']
    #allocation3 [shape = 's32[2]{0}', space=sflag, size = 0x8, scoped, tag = 'scoped memory for spotlight_forward.3']
    %7 = vsyncpa [#allocation3], 0
    %s8 = scalar_lea.sflag [#allocation3], 1
    %9 = vsyncpa %s8, 0
    loop: start=0, step=1, limit=4
    $region2: #{spotlight_forward.3} parent=1 // loop_pre_header
      _
    $region3: #{spotlight_forward.3} parent=1 // loop_header
      %s11 = sphi 0, %s15
      %p12 = scmp.ge.s32.totalorder %s11, 4
      %s18 = sphi 0, %s30
      %s19 = sphi 0, %s26
      %s20 = sphi 0, %s18
      %s21 = sphi 0, %s19
      %s22 = sphi 0, %s20
      %s23 = sphi 0, %s21
      %s33 = sphi 0, %s35
      %s36 = sphi 0, %s33
      %s37 = sphi 0, %s36
      %s53 = sphi 0, %s37
      %s59 = sphi 0, %s61
      %s62 = sphi 0, %s59
      %s63 = sphi 0, %s62
      %s79 = sphi 0, %s63
      %s87 = sphi 0, %s89
      %s90 = sphi 0, %s87
      %s91 = sphi 0, %s90
      %s107 = sphi 0, %s91
    $region4: #{spotlight_forward.3} parent=1 // loop_header_branch
      %14 = sbr.rel (%p12) target = $region8
    $region5: #{spotlight_forward.3} parent=1 // loop_body
      %s16 = ssub.s32 %s11, 1
      %s17 = ssub.s32 %s11, 2
      %s24 = sadd.s32 1, %s19
      %p25 = scmp.ge.s32.totalorder %s24, 2
      %s26 = scalar_select %p25, 0, %s24
      %s27 = sadd.s32 1, %s18
      %s28 = scalar_select %p25, %s27, %s18
      %p29 = scmp.ge.s32.totalorder %s28, 1
      %s30 = scalar_select %p29, 0, %s28
      %s31 = ssub.s32 %s19, %s26
      %p32 = scmp.eq.s32.totalorder %s31, 0
      %s34 = sadd.s32 %s33, 1
      %s35 = scalar_select %p32, %s33, %s34
      %p38 = pneg %p32
      %p39 = scmp.eq.s32.totalorder %s11, 1
      %p40 = por %p38, %p39
      %p41 = scmp.ne.s32.totalorder %s33, %s36
      %p42 = scmp.eq.s32.totalorder %s11, 0
      %p43 = por %p41, %p42
      %p44 = scmp.ne.s32.totalorder %s33, %s36
      %p45 = scmp.eq.s32.totalorder %s16, 1
      %p46 = por %p44, %p45
      %p47 = scmp.ne.s32.totalorder %s36, %s37
      %p48 = scmp.eq.s32.totalorder %s16, 0
      %p49 = por %p47, %p48
      %p50 = scmp.ne.s32.totalorder %s36, %s37
      %p51 = scmp.eq.s32.totalorder %s17, 1
      %p52 = por %p50, %p51
      %p54 = scmp.ne.s32.totalorder %s37, %s53
      %p55 = scmp.eq.s32.totalorder %s17, 0
      %p56 = por %p54, %p55
      %s57 = ssub.s32 %s18, %s30
      %p58 = scmp.eq.s32.totalorder %s57, 0
      %s60 = sadd.s32 %s59, 1
      %s61 = scalar_select %p58, %s59, %s60
      %p64 = pneg %p58
      %p65 = scmp.eq.s32.totalorder %s11, 1
      %p66 = por %p64, %p65
      %p67 = scmp.ne.s32.totalorder %s59, %s62
      %p68 = scmp.eq.s32.totalorder %s11, 0
      %p69 = por %p67, %p68
      %p70 = scmp.ne.s32.totalorder %s59, %s62
      %p71 = scmp.eq.s32.totalorder %s16, 1
      %p72 = por %p70, %p71
      %p73 = scmp.ne.s32.totalorder %s62, %s63
      %p74 = scmp.eq.s32.totalorder %s16, 0
      %p75 = por %p73, %p74
      %p76 = scmp.ne.s32.totalorder %s62, %s63
      %p77 = scmp.eq.s32.totalorder %s17, 1
      %p78 = por %p76, %p77
      %p80 = scmp.ne.s32.totalorder %s63, %s79
      %p81 = scmp.eq.s32.totalorder %s17, 0
      %p82 = por %p80, %p81
      %s83 = ssub.s32 %s19, %s26
      %s84 = ssub.s32 %s18, %s30
      %s85 = sor.u32 %s83, %s84
      %p86 = scmp.eq.s32.totalorder %s85, 0
      %s88 = sadd.s32 %s87, 1
      %s89 = scalar_select %p86, %s87, %s88
      %p92 = pneg %p86
      %p93 = scmp.eq.s32.totalorder %s11, 1
      %p94 = por %p92, %p93
      %p95 = scmp.ne.s32.totalorder %s87, %s90
      %p96 = scmp.eq.s32.totalorder %s11, 0
      %p97 = por %p95, %p96
      %p98 = scmp.ne.s32.totalorder %s87, %s90
      %p99 = scmp.eq.s32.totalorder %s16, 1
      %p100 = por %p98, %p99
      %p101 = scmp.ne.s32.totalorder %s90, %s91
      %p102 = scmp.eq.s32.totalorder %s16, 0
      %p103 = por %p101, %p102
      %p104 = scmp.ne.s32.totalorder %s90, %s91
      %p105 = scmp.eq.s32.totalorder %s17, 1
      %p106 = por %p104, %p105
      %p108 = scmp.ne.s32.totalorder %s91, %s107
      %p109 = scmp.eq.s32.totalorder %s17, 0
      %p110 = por %p108, %p109
      %p111 = scmp.le.s32.totalorder 1, %s11
      %p112 = scmp.lt.s32.totalorder %s11, 3
      %p113 = pnand %p111, %p112
      %p114 = pneg %p113
      // Predicated region
      $region9: #{spotlight_forward.3} parent=5 // pred_check
        _
      $region10: #{spotlight_forward.3} parent=5 // pred_check_branch
        %116 = sbr.rel (%p113) target = $region12
      $region11: #{spotlight_forward.3} parent=5 // pred_region
        %s117 = ssub.s32 %s11, 1
        // Predicated region
        $region13: #{spotlight_forward.3} parent=11 // pred_check
          %p118 = pneg %p75
        $region14: #{spotlight_forward.3} parent=11 // pred_check_branch
          %120 = sbr.rel (%p118) target = $region16
        $region15: #{spotlight_forward.3} parent=11 // pred_region
          %s121 = smul.u32 2, %s20
          %p122 = scmp.lt.s32.totalorder %s121, 1
          %s123 = scalar_select %p122, %s121, 1
          %s124 = smul.addr %s123, 8
          %s125 = scalar_lea.vmem %s1, %s124
          %s126 = smul.u32 2, %s20
        $region16: #{spotlight_forward.3} parent=11 // pred_fallthru
          _
      $region12: #{spotlight_forward.3} parent=5 // pred_fallthru
        _
      %p127 = scmp.lt.s32.totalorder %s11, 2
      // Predicated region
      $region17: #{spotlight_forward.3} parent=5 // pred_check
        %p128 = pneg %p127
      $region18: #{spotlight_forward.3} parent=5 // pred_check_branch
        %130 = sbr.rel (%p128) target = $region20
      $region19: #{spotlight_forward.3} parent=5 // pred_region
        // Predicated region
        $region21: #{spotlight_forward.3} parent=19 // pred_check
          %p131 = pneg %p43
        $region22: #{spotlight_forward.3} parent=19 // pred_check_branch
          %133 = sbr.rel (%p131) target = $region24
        $region23: #{spotlight_forward.3} parent=19 // pred_region
          %s134 = smul.u32 4, %s19
          %p135 = scmp.lt.s32.totalorder %s134, 7
          %s136 = scalar_select %p135, %s134, 7
          %s137 = smul.addr %s136, 8
          %s138 = scalar_lea.vmem %s0, %s137
          %s139 = smul.u32 4, %s19
        $region24: #{spotlight_forward.3} parent=19 // pred_fallthru
          _
      $region20: #{spotlight_forward.3} parent=5 // pred_fallthru
        _
      %p140 = scmp.le.s32.totalorder 1, %s11
      %p141 = scmp.lt.s32.totalorder %s11, 3
      %p142 = pnand %p140, %p141
      %p143 = pneg %p142
      // Predicated region
      $region25: #{spotlight_forward.3} parent=5 // pred_check
        _
      $region26: #{spotlight_forward.3} parent=5 // pred_check_branch
        %145 = sbr.rel (%p142) target = $region28
      $region27: #{spotlight_forward.3} parent=5 // pred_region
        %s146 = ssub.s32 %s11, 1
        %s147 = smul.u32 4, %s21
        %p148 = scmp.lt.s32.totalorder %s147, 7
        %s149 = scalar_select %p148, %s147, 7
        %s150 = smul.addr %s149, 8
        %s151 = scalar_lea.vmem %s0, %s150
        %p152 = pneg %p49
        %p153 = pneg %p46
        %s154 = smul.u32 2, %s20
        %p155 = scmp.lt.s32.totalorder %s154, 1
        %s156 = scalar_select %p155, %s154, 1
        %s157 = smul.addr %s156, 8
        %s158 = scalar_lea.vmem %s1, %s157
        %p159 = pneg %p75
        %p160 = pneg %p72
        %p161 = pneg %p103
        %p162 = pneg %p100
        %s163 = sand.u32 %s90, 1
        %s164 = scalar_lea.sflag [#allocation3], %s163
        %s165 = sand.u32 %s90, 1
        %s166 = smul.addr %s165, 64
        %s167 = scalar_lea.vmem [#allocation2], %s166
        %s168 = smul.u32 4, %s21
        %p169 = scmp.lt.s32.totalorder %s168, 7
        %s170 = scalar_select %p169, %s168, 7
        %s171 = smul.addr %s170, 8
        %s172 = scalar_lea.vmem %s0, %s171
        %s173 = smul.u32 4, %s21
        %s174 = smul.u32 2, %s20
        %p175 = scmp.lt.s32.totalorder %s174, 1
        %s176 = scalar_select %p175, %s174, 1
        %s177 = smul.addr %s176, 8
        %s178 = scalar_lea.vmem %s1, %s177
        %s179 = smul.u32 2, %s20
        %s180 = smul.u32 4, %s21
        %s181 = smul.u32 2, %s20
        %v182 = vld [vmem:[%s172] sm:$0xff]
        %v183 = vld [vmem:[%s172 + $0x8] sm:$0xff]
        %v184 = vld [vmem:[%s172 + $0x10] sm:$0xff]
        %v185 = vld [vmem:[%s172 + $0x18] sm:$0xff]
        %v186 = vld [vmem:[%s178] sm:$0xff]
        %v187 = vld [vmem:[%s178 + $0x8] sm:$0xff]
        %v188 = vld [vmem:[%s178 + $0x10] sm:$0xff]
        %v189 = vld [vmem:[%s178 + $0x18] sm:$0xff]
        %v190 = vld [vmem:[%s178 + $0x20] sm:$0xff]
        %v191 = vld [vmem:[%s178 + $0x28] sm:$0xff]
        %v192 = vld [vmem:[%s178 + $0x30] sm:$0xff]
        %v193 = vld [vmem:[%s178 + $0x38] sm:$0xff]
        %v194 = vxor.u32 %v186, 2147483648
        %v195 = vxor.u32 %v187, 2147483648
        %v196 = vxor.u32 %v188, 2147483648
        %v197 = vxor.u32 %v189, 2147483648
        %v198 = vxor.u32 %v190, 2147483648
        %v199 = vxor.u32 %v191, 2147483648
        %v200 = vxor.u32 %v192, 2147483648
        %v201 = vxor.u32 %v193, 2147483648
        %v202 = vmul.f32 %v194, 1.442695
        %v203 = vpow.pop %v202
        %v204 = vmul.f32 %v195, 1.442695
        %v205 = vpow.pop %v204
        %v206 = vmul.f32 %v196, 1.442695
        %v207 = vpow.pop %v206
        %v208 = vmul.f32 %v197, 1.442695
        %v209 = vpow.pop %v208
        %v210 = vmul.f32 %v198, 1.442695
        %v211 = vpow.pop %v210
        %v212 = vmul.f32 %v199, 1.442695
        %v213 = vpow.pop %v212
        %v214 = vmul.f32 %v200, 1.442695
        %v215 = vpow.pop %v214
        %v216 = vmul.f32 %v201, 1.442695
        %v217 = vpow.pop %v216
        %v218 = vadd.f32 %v203, 1.0
        %v219 = vadd.f32 %v205, 1.0
        %v220 = vadd.f32 %v207, 1.0
        %v221 = vadd.f32 %v209, 1.0
        %v222 = vadd.f32 %v211, 1.0
        %v223 = vadd.f32 %v213, 1.0
        %v224 = vadd.f32 %v215, 1.0
        %v225 = vadd.f32 %v217, 1.0
        %v226 = vrcp.pop %v218
        %v227 = vmul.f32 1.0, %v226
        %v228 = vrcp.pop %v219
        %v229 = vmul.f32 1.0, %v228
        %v230 = vrcp.pop %v220
        %v231 = vmul.f32 1.0, %v230
        %v232 = vrcp.pop %v221
        %v233 = vmul.f32 1.0, %v232
        %v234 = vrcp.pop %v222
        %v235 = vmul.f32 1.0, %v234
        %v236 = vrcp.pop %v223
        %v237 = vmul.f32 1.0, %v236
        %v238 = vrcp.pop %v224
        %v239 = vmul.f32 1.0, %v238
        %v240 = vrcp.pop %v225
        %v241 = vmul.f32 1.0, %v240
        %vm242 = vcmask 261120
        %v244 = vsel %vm242, %v182, 0
        %v247 = vsel %vm242, %v183, 0
        %v250 = vsel %vm242, %v184, 0
        %v253 = vsel %vm242, %v185, 0
        %v255 = vand.u32 %v229, 4294901760
        %256 = vmatprep.subr.mxu0 %v255
        %v257 = vand.u32 %v227, 4294901760
        %258 = vmatpush1.msra.mxu0 %v257
        %v259 = vand.u32 %v233, 4294901760
        %260 = vmatprep.subr.mxu0 %v259
        %v261 = vand.u32 %v231, 4294901760
        %262 = vmatpush1.msra.mxu0 %v261
        %v263 = vand.u32 %v237, 4294901760
        %264 = vmatprep.subr.mxu0 %v263
        %v265 = vand.u32 %v235, 4294901760
        %266 = vmatpush1.msra.mxu0 %v265
        %v267 = vand.u32 %v241, 4294901760
        %268 = vmatprep.subr.mxu0 %v267
        %v269 = vand.u32 %v239, 4294901760
        %270 = vmatpush1.msra.mxu0 %v269
        %271 = vmatprep.subr.mxu0 0.0
        %272 = vmatpush1.msra.mxu0 0.0
        %273 = vmatprep.subr.mxu0 0.0
        %274 = vmatpush1.msra.mxu0 0.0
        %275 = vmatprep.subr.mxu0 0.0
        %276 = vmatpush1.msra.mxu0 0.0
        %277 = vmatprep.subr.mxu0 0.0
        %278 = vmatpush1.msra.mxu0 0.0
        %279 = vmatprep.subr.mxu0 0.0
        %280 = vmatpush1.msra.mxu0 0.0
        %281 = vmatprep.subr.mxu0 0.0
        %282 = vmatpush1.msra.mxu0 0.0
        %283 = vmatprep.subr.mxu0 0.0
        %284 = vmatpush1.msra.mxu0 0.0
        %285 = vmatprep.subr.mxu0 0.0
        %286 = vmatpush1.msra.mxu0 0.0
        %287 = vmatprep.subr.mxu0 0.0
        %288 = vmatpush1.msra.mxu0 0.0
        %289 = vmatprep.subr.mxu0 0.0
        %290 = vmatpush1.msra.mxu0 0.0
        %291 = vmatprep.subr.mxu0 0.0
        %292 = vmatpush1.msra.mxu0 0.0
        %293 = vmatprep.subr.mxu0 0.0
        %294 = vmatpush1.msra.mxu0 0.0
        %295 = vmatprep.subr.mxu0 0.0
        %296 = vmatpush1.msra.mxu0 0.0
        %297 = vmatprep.subr.mxu0 0.0
        %298 = vmatpush1.msra.mxu0 0.0
        %299 = vmatprep.subr.mxu0 0.0
        %300 = vmatpush1.msra.mxu0 0.0
        %301 = vmatprep.subr.mxu0 0.0
        %302 = vmatpush1.msra.mxu0 0.0
        %303 = vmatprep.subr.mxu0 0.0
        %304 = vmatpush1.msra.mxu0 0.0
        %305 = vmatprep.subr.mxu0 0.0
        %306 = vmatpush1.msra.mxu0 0.0
        %307 = vmatprep.subr.mxu0 0.0
        %308 = vmatpush1.msra.mxu0 0.0
        %309 = vmatprep.subr.mxu0 0.0
        %310 = vmatpush1.msra.mxu0 0.0
        %311 = vmatprep.subr.mxu0 0.0
        %312 = vmatpush1.msra.mxu0 0.0
        %313 = vmatprep.subr.mxu0 0.0
        %314 = vmatpush1.msra.mxu0 0.0
        %315 = vmatprep.subr.mxu0 0.0
        %316 = vmatpush1.msra.mxu0 0.0
        %317 = vmatprep.subr.mxu0 0.0
        %318 = vmatpush1.msra.mxu0 0.0
        %319 = vmatprep.subr.mxu0 0.0
        %320 = vmatpush1.msra.mxu0 0.0
        %321 = vmatprep.subr.mxu0 0.0
        %322 = vmatpush1.msra.mxu0 0.0
        %323 = vmatprep.subr.mxu0 0.0
        %324 = vmatpush1.msra.mxu0 0.0
        %325 = vmatprep.subr.mxu0 0.0
        %326 = vmatpush1.msra.mxu0 0.0
        %327 = vmatprep.mubr.f32.mxu0 0.0
        %v328 = vand.u32 %v244, 4294901760
        %v329 = vsub.f32 %v244, %v328
        %v330 = vand.u32 %v329, 4294901760
        %v331 = vsub.f32 %v329, %v330
        %v332 = vand.u32 %v331, 4294901760
        %333 = vmatmul.mubr.f32.gmra.mrb[0].mxu0 %v332
        %v334 = vpop.f32.mrb[0].mxu0
        %v335 = vadd.f32 0.0, %v334
        %v336 = vpop.f32.mrb[0].mxu0
        %v337 = vadd.f32 0.0, %v336
        %338 = vmatprep.mubr.f32.mxu0 0.0
        %v339 = vand.u32 %v247, 4294901760
        %v340 = vsub.f32 %v247, %v339
        %v341 = vand.u32 %v340, 4294901760
        %v342 = vsub.f32 %v340, %v341
        %v343 = vand.u32 %v342, 4294901760
        %344 = vmatmul.mubr.f32.gmra.mrb[0].mxu0 %v343
        %v345 = vpop.f32.mrb[0].mxu0
        %v346 = vadd.f32 0.0, %v345
        %v347 = vpop.f32.mrb[0].mxu0
        %v348 = vadd.f32 0.0, %v347
        %349 = vmatprep.mubr.f32.mxu0 0.0
        %v350 = vand.u32 %v250, 4294901760
        %v351 = vsub.f32 %v250, %v350
        %v352 = vand.u32 %v351, 4294901760
        %v353 = vsub.f32 %v351, %v352
        %v354 = vand.u32 %v353, 4294901760
        %355 = vmatmul.mubr.f32.gmra.mrb[0].mxu0 %v354
        %v356 = vpop.f32.mrb[0].mxu0
        %v357 = vadd.f32 0.0, %v356
        %v358 = vpop.f32.mrb[0].mxu0
        %v359 = vadd.f32 0.0, %v358
        %360 = vmatprep.mubr.f32.mxu0 0.0
        %v361 = vand.u32 %v253, 4294901760
        %v362 = vsub.f32 %v253, %v361
        %v363 = vand.u32 %v362, 4294901760
        %v364 = vsub.f32 %v362, %v363
        %v365 = vand.u32 %v364, 4294901760
        %366 = vmatmul.mubr.f32.gmra.mrb[0].mxu0 %v365
        %v367 = vpop.f32.mrb[0].mxu0
        %v368 = vadd.f32 0.0, %v367
        %v369 = vpop.f32.mrb[0].mxu0
        %v370 = vadd.f32 0.0, %v369
        %371 = vdwg.mxu0
        %v372 = vand.u32 %v229, 4294901760
        %v373 = vsub.f32 %v229, %v372
        %v374 = vand.u32 %v373, 4294901760
        %v375 = vsub.f32 %v373, %v374
        %v376 = vand.u32 %v375, 4294901760
        %377 = vmatprep.subr.mxu0 %v376
        %v378 = vand.u32 %v227, 4294901760
        %v379 = vsub.f32 %v227, %v378
        %v380 = vand.u32 %v379, 4294901760
        %v381 = vsub.f32 %v379, %v380
        %v382 = vand.u32 %v381, 4294901760
        %383 = vmatpush1.msra.mxu0 %v382
        %v384 = vand.u32 %v233, 4294901760
        %v385 = vsub.f32 %v233, %v384
        %v386 = vand.u32 %v385, 4294901760
        %v387 = vsub.f32 %v385, %v386
        %v388 = vand.u32 %v387, 4294901760
        %389 = vmatprep.subr.mxu0 %v388
        %v390 = vand.u32 %v231, 4294901760
        %v391 = vsub.f32 %v231, %v390
        %v392 = vand.u32 %v391, 4294901760
        %v393 = vsub.f32 %v391, %v392
        %v394 = vand.u32 %v393, 4294901760
        %395 = vmatpush1.msra.mxu0 %v394
        %v396 = vand.u32 %v237, 4294901760
        %v397 = vsub.f32 %v237, %v396
        %v398 = vand.u32 %v397, 4294901760
        %v399 = vsub.f32 %v397, %v398
        %v400 = vand.u32 %v399, 4294901760
        %401 = vmatprep.subr.mxu0 %v400
        %v402 = vand.u32 %v235, 4294901760
        %v403 = vsub.f32 %v235, %v402
        %v404 = vand.u32 %v403, 4294901760
        %v405 = vsub.f32 %v403, %v404
        %v406 = vand.u32 %v405, 4294901760
        %407 = vmatpush1.msra.mxu0 %v406
        %v408 = vand.u32 %v241, 4294901760
        %v409 = vsub.f32 %v241, %v408
        %v410 = vand.u32 %v409, 4294901760
        %v411 = vsub.f32 %v409, %v410
        %v412 = vand.u32 %v411, 4294901760
        %413 = vmatprep.subr.mxu0 %v412
        %v414 = vand.u32 %v239, 4294901760
        %v415 = vsub.f32 %v239, %v414
        %v416 = vand.u32 %v415, 4294901760
        %v417 = vsub.f32 %v415, %v416
        %v418 = vand.u32 %v417, 4294901760
        %419 = vmatpush1.msra.mxu0 %v418
        %420 = vmatprep.subr.mxu0 0.0
        %421 = vmatpush1.msra.mxu0 0.0
        %422 = vmatprep.subr.mxu0 0.0
        %423 = vmatpush1.msra.mxu0 0.0
        %424 = vmatprep.subr.mxu0 0.0
        %425 = vmatpush1.msra.mxu0 0.0
        %426 = vmatprep.subr.mxu0 0.0
        %427 = vmatpush1.msra.mxu0 0.0
        %428 = vmatprep.subr.mxu0 0.0
        %429 = vmatpush1.msra.mxu0 0.0
        %430 = vmatprep.subr.mxu0 0.0
        %431 = vmatpush1.msra.mxu0 0.0
        %432 = vmatprep.subr.mxu0 0.0
        %433 = vmatpush1.msra.mxu0 0.0
        %434 = vmatprep.subr.mxu0 0.0
        %435 = vmatpush1.msra.mxu0 0.0
        %436 = vmatprep.subr.mxu0 0.0
        %437 = vmatpush1.msra.mxu0 0.0
        %438 = vmatprep.subr.mxu0 0.0
        %439 = vmatpush1.msra.mxu0 0.0
        %440 = vmatprep.subr.mxu0 0.0
        %441 = vmatpush1.msra.mxu0 0.0
        %442 = vmatprep.subr.mxu0 0.0
        %443 = vmatpush1.msra.mxu0 0.0
        %444 = vmatprep.subr.mxu0 0.0
        %445 = vmatpush1.msra.mxu0 0.0
        %446 = vmatprep.subr.mxu0 0.0
        %447 = vmatpush1.msra.mxu0 0.0
        %448 = vmatprep.subr.mxu0 0.0
        %449 = vmatpush1.msra.mxu0 0.0
        %450 = vmatprep.subr.mxu0 0.0
        %451 = vmatpush1.msra.mxu0 0.0
        %452 = vmatprep.subr.mxu0 0.0
        %453 = vmatpush1.msra.mxu0 0.0
        %454 = vmatprep.subr.mxu0 0.0
        %455 = vmatpush1.msra.mxu0 0.0
        %456 = vmatprep.subr.mxu0 0.0
        %457 = vmatpush1.msra.mxu0 0.0
        %458 = vmatprep.subr.mxu0 0.0
        %459 = vmatpush1.msra.mxu0 0.0
        %460 = vmatprep.subr.mxu0 0.0
        %461 = vmatpush1.msra.mxu0 0.0
        %462 = vmatprep.subr.mxu0 0.0
        %463 = vmatpush1.msra.mxu0 0.0
        %464 = vmatprep.subr.mxu0 0.0
        %465 = vmatpush1.msra.mxu0 0.0
        %466 = vmatprep.subr.mxu0 0.0
        %467 = vmatpush1.msra.mxu0 0.0
        %468 = vmatprep.subr.mxu0 0.0
        %469 = vmatpush1.msra.mxu0 0.0
        %470 = vmatprep.subr.mxu0 0.0
        %471 = vmatpush1.msra.mxu0 0.0
        %472 = vmatprep.subr.mxu0 0.0
        %473 = vmatpush1.msra.mxu0 0.0
        %474 = vmatprep.subr.mxu0 0.0
        %475 = vmatpush1.msra.mxu0 0.0
        %476 = vmatprep.mubr.f32.mxu0 0.0
        %v477 = vand.u32 %v244, 4294901760
        %478 = vmatmul.mubr.f32.gmra.mrb[0].mxu0 %v477
        %v479 = vpop.f32.mrb[0].mxu0
        %v480 = vadd.f32 %v335, %v479
        %v481 = vpop.f32.mrb[0].mxu0
        %v482 = vadd.f32 %v337, %v481
        %483 = vmatprep.mubr.f32.mxu0 0.0
        %v484 = vand.u32 %v247, 4294901760
        %485 = vmatmul.mubr.f32.gmra.mrb[0].mxu0 %v484
        %v486 = vpop.f32.mrb[0].mxu0
        %v487 = vadd.f32 %v346, %v486
        %v488 = vpop.f32.mrb[0].mxu0
        %v489 = vadd.f32 %v348, %v488
        %490 = vmatprep.mubr.f32.mxu0 0.0
        %v491 = vand.u32 %v250, 4294901760
        %492 = vmatmul.mubr.f32.gmra.mrb[0].mxu0 %v491
        %v493 = vpop.f32.mrb[0].mxu0
        %v494 = vadd.f32 %v357, %v493
        %v495 = vpop.f32.mrb[0].mxu0
        %v496 = vadd.f32 %v359, %v495
        %497 = vmatprep.mubr.f32.mxu0 0.0
        %v498 = vand.u32 %v253, 4294901760
        %499 = vmatmul.mubr.f32.gmra.mrb[0].mxu0 %v498
        %v500 = vpop.f32.mrb[0].mxu0
        %v501 = vadd.f32 %v368, %v500
        %v502 = vpop.f32.mrb[0].mxu0
        %v503 = vadd.f32 %v370, %v502
        %504 = vdwg.mxu0
        %v505 = vand.u32 %v229, 4294901760
        %v506 = vsub.f32 %v229, %v505
        %507 = vmatprep.subr.mxu0 %v506
        %v508 = vand.u32 %v227, 4294901760
        %v509 = vsub.f32 %v227, %v508
        %510 = vmatpush1.msra.mxu0 %v509
        %v511 = vand.u32 %v233, 4294901760
        %v512 = vsub.f32 %v233, %v511
        %513 = vmatprep.subr.mxu0 %v512
        %v514 = vand.u32 %v231, 4294901760
        %v515 = vsub.f32 %v231, %v514
        %516 = vmatpush1.msra.mxu0 %v515
        %v517 = vand.u32 %v237, 4294901760
        %v518 = vsub.f32 %v237, %v517
        %519 = vmatprep.subr.mxu0 %v518
        %v520 = vand.u32 %v235, 4294901760
        %v521 = vsub.f32 %v235, %v520
        %522 = vmatpush1.msra.mxu0 %v521
        %v523 = vand.u32 %v241, 4294901760
        %v524 = vsub.f32 %v241, %v523
        %525 = vmatprep.subr.mxu0 %v524
        %v526 = vand.u32 %v239, 4294901760
        %v527 = vsub.f32 %v239, %v526
        %528 = vmatpush1.msra.mxu0 %v527
        %529 = vmatprep.subr.mxu0 0.0
        %530 = vmatpush1.msra.mxu0 0.0
        %531 = vmatprep.subr.mxu0 0.0
        %532 = vmatpush1.msra.mxu0 0.0
        %533 = vmatprep.subr.mxu0 0.0
        %534 = vmatpush1.msra.mxu0 0.0
        %535 = vmatprep.subr.mxu0 0.0
        %536 = vmatpush1.msra.mxu0 0.0
        %537 = vmatprep.subr.mxu0 0.0
        %538 = vmatpush1.msra.mxu0 0.0
        %539 = vmatprep.subr.mxu0 0.0
        %540 = vmatpush1.msra.mxu0 0.0
        %541 = vmatprep.subr.mxu0 0.0
        %542 = vmatpush1.msra.mxu0 0.0
        %543 = vmatprep.subr.mxu0 0.0
        %544 = vmatpush1.msra.mxu0 0.0
        %545 = vmatprep.subr.mxu0 0.0
        %546 = vmatpush1.msra.mxu0 0.0
        %547 = vmatprep.subr.mxu0 0.0
        %548 = vmatpush1.msra.mxu0 0.0
        %549 = vmatprep.subr.mxu0 0.0
        %550 = vmatpush1.msra.mxu0 0.0
        %551 = vmatprep.subr.mxu0 0.0
        %552 = vmatpush1.msra.mxu0 0.0
        %553 = vmatprep.subr.mxu0 0.0
        %554 = vmatpush1.msra.mxu0 0.0
        %555 = vmatprep.subr.mxu0 0.0
        %556 = vmatpush1.msra.mxu0 0.0
        %557 = vmatprep.subr.mxu0 0.0
        %558 = vmatpush1.msra.mxu0 0.0
        %559 = vmatprep.subr.mxu0 0.0
        %560 = vmatpush1.msra.mxu0 0.0
        %561 = vmatprep.subr.mxu0 0.0
        %562 = vmatpush1.msra.mxu0 0.0
        %563 = vmatprep.subr.mxu0 0.0
        %564 = vmatpush1.msra.mxu0 0.0
        %565 = vmatprep.subr.mxu0 0.0
        %566 = vmatpush1.msra.mxu0 0.0
        %567 = vmatprep.subr.mxu0 0.0
        %568 = vmatpush1.msra.mxu0 0.0
        %569 = vmatprep.subr.mxu0 0.0
        %570 = vmatpush1.msra.mxu0 0.0
        %571 = vmatprep.subr.mxu0 0.0
        %572 = vmatpush1.msra.mxu0 0.0
        %573 = vmatprep.subr.mxu0 0.0
        %574 = vmatpush1.msra.mxu0 0.0
        %575 = vmatprep.subr.mxu0 0.0
        %576 = vmatpush1.msra.mxu0 0.0
        %577 = vmatprep.subr.mxu0 0.0
        %578 = vmatpush1.msra.mxu0 0.0
        %579 = vmatprep.subr.mxu0 0.0
        %580 = vmatpush1.msra.mxu0 0.0
        %581 = vmatprep.subr.mxu0 0.0
        %582 = vmatpush1.msra.mxu0 0.0
        %583 = vmatprep.subr.mxu0 0.0
        %584 = vmatpush1.msra.mxu0 0.0
        %585 = vmatprep.mubr.f32.mxu0 0.0
        %v586 = vand.u32 %v244, 4294901760
        %v587 = vsub.f32 %v244, %v586
        %588 = vmatmul.mubr.f32.gmra.mrb[0].mxu0 %v587
        %v589 = vpop.f32.mrb[0].mxu0
        %v590 = vadd.f32 %v480, %v589
        %v591 = vpop.f32.mrb[0].mxu0
        %v592 = vadd.f32 %v482, %v591
        %593 = vmatprep.mubr.f32.mxu0 0.0
        %v594 = vand.u32 %v247, 4294901760
        %v595 = vsub.f32 %v247, %v594
        %596 = vmatmul.mubr.f32.gmra.mrb[0].mxu0 %v595
        %v597 = vpop.f32.mrb[0].mxu0
        %v598 = vadd.f32 %v487, %v597
        %v599 = vpop.f32.mrb[0].mxu0
        %v600 = vadd.f32 %v489, %v599
        %601 = vmatprep.mubr.f32.mxu0 0.0
        %v602 = vand.u32 %v250, 4294901760
        %v603 = vsub.f32 %v250, %v602
        %604 = vmatmul.mubr.f32.gmra.mrb[0].mxu0 %v603
        %v605 = vpop.f32.mrb[0].mxu0
        %v606 = vadd.f32 %v494, %v605
        %v607 = vpop.f32.mrb[0].mxu0
        %v608 = vadd.f32 %v496, %v607
        %609 = vmatprep.mubr.f32.mxu0 0.0
        %v610 = vand.u32 %v253, 4294901760
        %v611 = vsub.f32 %v253, %v610
        %612 = vmatmul.mubr.f32.gmra.mrb[0].mxu0 %v611
        %v613 = vpop.f32.mrb[0].mxu0
        %v614 = vadd.f32 %v501, %v613
        %v615 = vpop.f32.mrb[0].mxu0
        %v616 = vadd.f32 %v503, %v615
        %617 = vdwg.mxu0
        %v618 = vand.u32 %v229, 4294901760
        %619 = vmatprep.subr.mxu0 %v618
        %v620 = vand.u32 %v227, 4294901760
        %621 = vmatpush1.msra.mxu0 %v620
        %v622 = vand.u32 %v233, 4294901760
        %623 = vmatprep.subr.mxu0 %v622
        %v624 = vand.u32 %v231, 4294901760
        %625 = vmatpush1.msra.mxu0 %v624
        %v626 = vand.u32 %v237, 4294901760
        %627 = vmatprep.subr.mxu0 %v626
        %v628 = vand.u32 %v235, 4294901760
        %629 = vmatpush1.msra.mxu0 %v628
        %v630 = vand.u32 %v241, 4294901760
        %631 = vmatprep.subr.mxu0 %v630
        %v632 = vand.u32 %v239, 4294901760
        %633 = vmatpush1.msra.mxu0 %v632
        %634 = vmatprep.subr.mxu0 0.0
        %635 = vmatpush1.msra.mxu0 0.0
        %636 = vmatprep.subr.mxu0 0.0
        %637 = vmatpush1.msra.mxu0 0.0
        %638 = vmatprep.subr.mxu0 0.0
        %639 = vmatpush1.msra.mxu0 0.0
        %640 = vmatprep.subr.mxu0 0.0
        %641 = vmatpush1.msra.mxu0 0.0
        %642 = vmatprep.subr.mxu0 0.0
        %643 = vmatpush1.msra.mxu0 0.0
        %644 = vmatprep.subr.mxu0 0.0
        %645 = vmatpush1.msra.mxu0 0.0
        %646 = vmatprep.subr.mxu0 0.0
        %647 = vmatpush1.msra.mxu0 0.0
        %648 = vmatprep.subr.mxu0 0.0
        %649 = vmatpush1.msra.mxu0 0.0
        %650 = vmatprep.subr.mxu0 0.0
        %651 = vmatpush1.msra.mxu0 0.0
        %652 = vmatprep.subr.mxu0 0.0
        %653 = vmatpush1.msra.mxu0 0.0
        %654 = vmatprep.subr.mxu0 0.0
        %655 = vmatpush1.msra.mxu0 0.0
        %656 = vmatprep.subr.mxu0 0.0
        %657 = vmatpush1.msra.mxu0 0.0
        %658 = vmatprep.subr.mxu0 0.0
        %659 = vmatpush1.msra.mxu0 0.0
        %660 = vmatprep.subr.mxu0 0.0
        %661 = vmatpush1.msra.mxu0 0.0
        %662 = vmatprep.subr.mxu0 0.0
        %663 = vmatpush1.msra.mxu0 0.0
        %664 = vmatprep.subr.mxu0 0.0
        %665 = vmatpush1.msra.mxu0 0.0
        %666 = vmatprep.subr.mxu0 0.0
        %667 = vmatpush1.msra.mxu0 0.0
        %668 = vmatprep.subr.mxu0 0.0
        %669 = vmatpush1.msra.mxu0 0.0
        %670 = vmatprep.subr.mxu0 0.0
        %671 = vmatpush1.msra.mxu0 0.0
        %672 = vmatprep.subr.mxu0 0.0
        %673 = vmatpush1.msra.mxu0 0.0
        %674 = vmatprep.subr.mxu0 0.0
        %675 = vmatpush1.msra.mxu0 0.0
        %676 = vmatprep.subr.mxu0 0.0
        %677 = vmatpush1.msra.mxu0 0.0
        %678 = vmatprep.subr.mxu0 0.0
        %679 = vmatpush1.msra.mxu0 0.0
        %680 = vmatprep.subr.mxu0 0.0
        %681 = vmatpush1.msra.mxu0 0.0
        %682 = vmatprep.subr.mxu0 0.0
        %683 = vmatpush1.msra.mxu0 0.0
        %684 = vmatprep.subr.mxu0 0.0
        %685 = vmatpush1.msra.mxu0 0.0
        %686 = vmatprep.subr.mxu0 0.0
        %687 = vmatpush1.msra.mxu0 0.0
        %688 = vmatprep.subr.mxu0 0.0
        %689 = vmatpush1.msra.mxu0 0.0
        %690 = vmatprep.mubr.f32.mxu0 0.0
        %v691 = vand.u32 %v244, 4294901760
        %v692 = vsub.f32 %v244, %v691
        %v693 = vand.u32 %v692, 4294901760
        %694 = vmatmul.mubr.f32.gmra.mrb[0].mxu0 %v693
        %v695 = vpop.f32.mrb[0].mxu0
        %v696 = vadd.f32 %v590, %v695
        %v697 = vpop.f32.mrb[0].mxu0
        %v698 = vadd.f32 %v592, %v697
        %699 = vmatprep.mubr.f32.mxu0 0.0
        %v700 = vand.u32 %v247, 4294901760
        %v701 = vsub.f32 %v247, %v700
        %v702 = vand.u32 %v701, 4294901760
        %703 = vmatmul.mubr.f32.gmra.mrb[0].mxu0 %v702
        %v704 = vpop.f32.mrb[0].mxu0
        %v705 = vadd.f32 %v598, %v704
        %v706 = vpop.f32.mrb[0].mxu0
        %v707 = vadd.f32 %v600, %v706
        %708 = vmatprep.mubr.f32.mxu0 0.0
        %v709 = vand.u32 %v250, 4294901760
        %v710 = vsub.f32 %v250, %v709
        %v711 = vand.u32 %v710, 4294901760
        %712 = vmatmul.mubr.f32.gmra.mrb[0].mxu0 %v711
        %v713 = vpop.f32.mrb[0].mxu0
        %v714 = vadd.f32 %v606, %v713
        %v715 = vpop.f32.mrb[0].mxu0
        %v716 = vadd.f32 %v608, %v715
        %717 = vmatprep.mubr.f32.mxu0 0.0
        %v718 = vand.u32 %v253, 4294901760
        %v719 = vsub.f32 %v253, %v718
        %v720 = vand.u32 %v719, 4294901760
        %721 = vmatmul.mubr.f32.gmra.mrb[0].mxu0 %v720
        %v722 = vpop.f32.mrb[0].mxu0
        %v723 = vadd.f32 %v614, %v722
        %v724 = vpop.f32.mrb[0].mxu0
        %v725 = vadd.f32 %v616, %v724
        %726 = vdwg.mxu0
        %v727 = vand.u32 %v229, 4294901760
        %v728 = vsub.f32 %v229, %v727
        %v729 = vand.u32 %v728, 4294901760
        %730 = vmatprep.subr.mxu0 %v729
        %v731 = vand.u32 %v227, 4294901760
        %v732 = vsub.f32 %v227, %v731
        %v733 = vand.u32 %v732, 4294901760
        %734 = vmatpush1.msra.mxu0 %v733
        %v735 = vand.u32 %v233, 4294901760
        %v736 = vsub.f32 %v233, %v735
        %v737 = vand.u32 %v736, 4294901760
        %738 = vmatprep.subr.mxu0 %v737
        %v739 = vand.u32 %v231, 4294901760
        %v740 = vsub.f32 %v231, %v739
        %v741 = vand.u32 %v740, 4294901760
        %742 = vmatpush1.msra.mxu0 %v741
        %v743 = vand.u32 %v237, 4294901760
        %v744 = vsub.f32 %v237, %v743
        %v745 = vand.u32 %v744, 4294901760
        %746 = vmatprep.subr.mxu0 %v745
        %v747 = vand.u32 %v235, 4294901760
        %v748 = vsub.f32 %v235, %v747
        %v749 = vand.u32 %v748, 4294901760
        %750 = vmatpush1.msra.mxu0 %v749
        %v751 = vand.u32 %v241, 4294901760
        %v752 = vsub.f32 %v241, %v751
        %v753 = vand.u32 %v752, 4294901760
        %754 = vmatprep.subr.mxu0 %v753
        %v755 = vand.u32 %v239, 4294901760
        %v756 = vsub.f32 %v239, %v755
        %v757 = vand.u32 %v756, 4294901760
        %758 = vmatpush1.msra.mxu0 %v757
        %759 = vmatprep.subr.mxu0 0.0
        %760 = vmatpush1.msra.mxu0 0.0
        %761 = vmatprep.subr.mxu0 0.0
        %762 = vmatpush1.msra.mxu0 0.0
        %763 = vmatprep.subr.mxu0 0.0
        %764 = vmatpush1.msra.mxu0 0.0
        %765 = vmatprep.subr.mxu0 0.0
        %766 = vmatpush1.msra.mxu0 0.0
        %767 = vmatprep.subr.mxu0 0.0
        %768 = vmatpush1.msra.mxu0 0.0
        %769 = vmatprep.subr.mxu0 0.0
        %770 = vmatpush1.msra.mxu0 0.0
        %771 = vmatprep.subr.mxu0 0.0
        %772 = vmatpush1.msra.mxu0 0.0
        %773 = vmatprep.subr.mxu0 0.0
        %774 = vmatpush1.msra.mxu0 0.0
        %775 = vmatprep.subr.mxu0 0.0
        %776 = vmatpush1.msra.mxu0 0.0
        %777 = vmatprep.subr.mxu0 0.0
        %778 = vmatpush1.msra.mxu0 0.0
        %779 = vmatprep.subr.mxu0 0.0
        %780 = vmatpush1.msra.mxu0 0.0
        %781 = vmatprep.subr.mxu0 0.0
        %782 = vmatpush1.msra.mxu0 0.0
        %783 = vmatprep.subr.mxu0 0.0
        %784 = vmatpush1.msra.mxu0 0.0
        %785 = vmatprep.subr.mxu0 0.0
        %786 = vmatpush1.msra.mxu0 0.0
        %787 = vmatprep.subr.mxu0 0.0
        %788 = vmatpush1.msra.mxu0 0.0
        %789 = vmatprep.subr.mxu0 0.0
        %790 = vmatpush1.msra.mxu0 0.0
        %791 = vmatprep.subr.mxu0 0.0
        %792 = vmatpush1.msra.mxu0 0.0
        %793 = vmatprep.subr.mxu0 0.0
        %794 = vmatpush1.msra.mxu0 0.0
        %795 = vmatprep.subr.mxu0 0.0
        %796 = vmatpush1.msra.mxu0 0.0
        %797 = vmatprep.subr.mxu0 0.0
        %798 = vmatpush1.msra.mxu0 0.0
        %799 = vmatprep.subr.mxu0 0.0
        %800 = vmatpush1.msra.mxu0 0.0
        %801 = vmatprep.subr.mxu0 0.0
        %802 = vmatpush1.msra.mxu0 0.0
        %803 = vmatprep.subr.mxu0 0.0
        %804 = vmatpush1.msra.mxu0 0.0
        %805 = vmatprep.subr.mxu0 0.0
        %806 = vmatpush1.msra.mxu0 0.0
        %807 = vmatprep.subr.mxu0 0.0
        %808 = vmatpush1.msra.mxu0 0.0
        %809 = vmatprep.subr.mxu0 0.0
        %810 = vmatpush1.msra.mxu0 0.0
        %811 = vmatprep.subr.mxu0 0.0
        %812 = vmatpush1.msra.mxu0 0.0
        %813 = vmatprep.subr.mxu0 0.0
        %814 = vmatpush1.msra.mxu0 0.0
        %815 = vmatprep.mubr.f32.mxu0 0.0
        %v816 = vand.u32 %v244, 4294901760
        %817 = vmatmul.mubr.f32.gmra.mrb[0].mxu0 %v816
        %v818 = vpop.f32.mrb[0].mxu0
        %v819 = vadd.f32 %v696, %v818
        %v820 = vpop.f32.mrb[0].mxu0
        %v821 = vadd.f32 %v698, %v820
        %822 = vmatprep.mubr.f32.mxu0 0.0
        %v823 = vand.u32 %v247, 4294901760
        %824 = vmatmul.mubr.f32.gmra.mrb[0].mxu0 %v823
        %v825 = vpop.f32.mrb[0].mxu0
        %v826 = vadd.f32 %v705, %v825
        %v827 = vpop.f32.mrb[0].mxu0
        %v828 = vadd.f32 %v707, %v827
        %829 = vmatprep.mubr.f32.mxu0 0.0
        %v830 = vand.u32 %v250, 4294901760
        %831 = vmatmul.mubr.f32.gmra.mrb[0].mxu0 %v830
        %v832 = vpop.f32.mrb[0].mxu0
        %v833 = vadd.f32 %v714, %v832
        %v834 = vpop.f32.mrb[0].mxu0
        %v835 = vadd.f32 %v716, %v834
        %836 = vmatprep.mubr.f32.mxu0 0.0
        %v837 = vand.u32 %v253, 4294901760
        %838 = vmatmul.mubr.f32.gmra.mrb[0].mxu0 %v837
        %v839 = vpop.f32.mrb[0].mxu0
        %v840 = vadd.f32 %v723, %v839
        %v841 = vpop.f32.mrb[0].mxu0
        %v842 = vadd.f32 %v725, %v841
        %843 = vdwg.mxu0
        %v844 = vand.u32 %v229, 4294901760
        %845 = vmatprep.subr.mxu0 %v844
        %v846 = vand.u32 %v227, 4294901760
        %847 = vmatpush1.msra.mxu0 %v846
        %v848 = vand.u32 %v233, 4294901760
        %849 = vmatprep.subr.mxu0 %v848
        %v850 = vand.u32 %v231, 4294901760
        %851 = vmatpush1.msra.mxu0 %v850
        %v852 = vand.u32 %v237, 4294901760
        %853 = vmatprep.subr.mxu0 %v852
        %v854 = vand.u32 %v235, 4294901760
        %855 = vmatpush1.msra.mxu0 %v854
        %v856 = vand.u32 %v241, 4294901760
        %857 = vmatprep.subr.mxu0 %v856
        %v858 = vand.u32 %v239, 4294901760
        %859 = vmatpush1.msra.mxu0 %v858
        %860 = vmatprep.subr.mxu0 0.0
        %861 = vmatpush1.msra.mxu0 0.0
        %862 = vmatprep.subr.mxu0 0.0
        %863 = vmatpush1.msra.mxu0 0.0
        %864 = vmatprep.subr.mxu0 0.0
        %865 = vmatpush1.msra.mxu0 0.0
        %866 = vmatprep.subr.mxu0 0.0
        %867 = vmatpush1.msra.mxu0 0.0
        %868 = vmatprep.subr.mxu0 0.0
        %869 = vmatpush1.msra.mxu0 0.0
        %870 = vmatprep.subr.mxu0 0.0
        %871 = vmatpush1.msra.mxu0 0.0
        %872 = vmatprep.subr.mxu0 0.0
        %873 = vmatpush1.msra.mxu0 0.0
        %874 = vmatprep.subr.mxu0 0.0
        %875 = vmatpush1.msra.mxu0 0.0
        %876 = vmatprep.subr.mxu0 0.0
        %877 = vmatpush1.msra.mxu0 0.0
        %878 = vmatprep.subr.mxu0 0.0
        %879 = vmatpush1.msra.mxu0 0.0
        %880 = vmatprep.subr.mxu0 0.0
        %881 = vmatpush1.msra.mxu0 0.0
        %882 = vmatprep.subr.mxu0 0.0
        %883 = vmatpush1.msra.mxu0 0.0
        %884 = vmatprep.subr.mxu0 0.0
        %885 = vmatpush1.msra.mxu0 0.0
        %886 = vmatprep.subr.mxu0 0.0
        %887 = vmatpush1.msra.mxu0 0.0
        %888 = vmatprep.subr.mxu0 0.0
        %889 = vmatpush1.msra.mxu0 0.0
        %890 = vmatprep.subr.mxu0 0.0
        %891 = vmatpush1.msra.mxu0 0.0
        %892 = vmatprep.subr.mxu0 0.0
        %893 = vmatpush1.msra.mxu0 0.0
        %894 = vmatprep.subr.mxu0 0.0
        %895 = vmatpush1.msra.mxu0 0.0
        %896 = vmatprep.subr.mxu0 0.0
        %897 = vmatpush1.msra.mxu0 0.0
        %898 = vmatprep.subr.mxu0 0.0
        %899 = vmatpush1.msra.mxu0 0.0
        %900 = vmatprep.subr.mxu0 0.0
        %901 = vmatpush1.msra.mxu0 0.0
        %902 = vmatprep.subr.mxu0 0.0
        %903 = vmatpush1.msra.mxu0 0.0
        %904 = vmatprep.subr.mxu0 0.0
        %905 = vmatpush1.msra.mxu0 0.0
        %906 = vmatprep.subr.mxu0 0.0
        %907 = vmatpush1.msra.mxu0 0.0
        %908 = vmatprep.subr.mxu0 0.0
        %909 = vmatpush1.msra.mxu0 0.0
        %910 = vmatprep.subr.mxu0 0.0
        %911 = vmatpush1.msra.mxu0 0.0
        %912 = vmatprep.subr.mxu0 0.0
        %913 = vmatpush1.msra.mxu0 0.0
        %914 = vmatprep.subr.mxu0 0.0
        %915 = vmatpush1.msra.mxu0 0.0
        %916 = vmatprep.mubr.f32.mxu0 0.0
        %v917 = vand.u32 %v244, 4294901760
        %918 = vmatmul.mubr.f32.gmra.mrb[0].mxu0 %v917
        %v919 = vpop.f32.mrb[0].mxu0
        %v920 = vadd.f32 %v819, %v919
        %v921 = vpop.f32.mrb[0].mxu0
        %v922 = vadd.f32 %v821, %v921
        %923 = vmatprep.mubr.f32.mxu0 0.0
        %v924 = vand.u32 %v247, 4294901760
        %925 = vmatmul.mubr.f32.gmra.mrb[0].mxu0 %v924
        %v926 = vpop.f32.mrb[0].mxu0
        %v927 = vadd.f32 %v826, %v926
        %v928 = vpop.f32.mrb[0].mxu0
        %v929 = vadd.f32 %v828, %v928
        %930 = vmatprep.mubr.f32.mxu0 0.0
        %v931 = vand.u32 %v250, 4294901760
        %932 = vmatmul.mubr.f32.gmra.mrb[0].mxu0 %v931
        %v933 = vpop.f32.mrb[0].mxu0
        %v934 = vadd.f32 %v833, %v933
        %v935 = vpop.f32.mrb[0].mxu0
        %v936 = vadd.f32 %v835, %v935
        %937 = vmatprep.mubr.f32.mxu0 0.0
        %v938 = vand.u32 %v253, 4294901760
        %939 = vmatmul.mubr.f32.gmra.mrb[0].mxu0 %v938
        %v940 = vpop.f32.mrb[0].mxu0
        %v941 = vadd.f32 %v840, %v940
        %v942 = vpop.f32.mrb[0].mxu0
        %v943 = vadd.f32 %v842, %v942
        %944 = vdwg.mxu0
        %945 = vst [vmem:[%s167] sm:$0xff] %v920
        %946 = vst [vmem:[%s167 + $0x8] sm:$0xff] %v922
        %947 = vst [vmem:[%s167 + $0x10] sm:$0xff] %v927
        %948 = vst [vmem:[%s167 + $0x18] sm:$0xff] %v929
        %949 = vst [vmem:[%s167 + $0x20] sm:$0xff] %v934
        %950 = vst [vmem:[%s167 + $0x28] sm:$0xff] %v936
        %951 = vst [vmem:[%s167 + $0x30] sm:$0xff] %v941
        %952 = vst [vmem:[%s167 + $0x38] sm:$0xff] %v943
        %s953 = sand.u32 %s90, 1
        %s954 = scalar_lea.sflag [#allocation3], %s953
        %s955 = sand.u32 %s90, 1
        %s956 = smul.addr %s955, 64
        %s957 = scalar_lea.vmem [#allocation2], %s956
        // Predicated region
        $region29: #{spotlight_forward.3} parent=27 // pred_check
          %p958 = pneg %p100
        $region30: #{spotlight_forward.3} parent=27 // pred_check_branch
          %960 = sbr.rel (%p958) target = $region32
        $region31: #{spotlight_forward.3} parent=27 // pred_region
          %s961 = smul.u32 4, %s21
          %s962 = smul.u32 2, %s20
          %s964 = ssub.s32 1024, 1024
          %965 = vsyncadd %s954, %s964
          %s966 = smul.addr %s961, 2
          %s967 = sadd.s32 %s962, %s966
          %s968 = smul.addr %s967, 128
          %s969 = scalar_lea.hbm %s2, %s968
          %s970 = sshll.u32 %s957, 4
          %s971 = int_to_ptr.vmem [resolvable:$true] %s970
          %976 = dma.vmem_to_hbm [thread:$0]  %s971, 1024, %s969, %s954, 256, 256, 16
        $region32: #{spotlight_forward.3} parent=27 // pred_fallthru
          _
      $region28: #{spotlight_forward.3} parent=5 // pred_fallthru
        _
      %p977 = scmp.le.s32.totalorder 2, %s11
      // Predicated region
      $region33: #{spotlight_forward.3} parent=5 // pred_check
        %p978 = pneg %p977
      $region34: #{spotlight_forward.3} parent=5 // pred_check_branch
        %980 = sbr.rel (%p978) target = $region36
      $region35: #{spotlight_forward.3} parent=5 // pred_region
        %s981 = ssub.s32 %s11, 2
        // Predicated region
        $region37: #{spotlight_forward.3} parent=35 // pred_check
          %p982 = pneg %p106
        $region38: #{spotlight_forward.3} parent=35 // pred_check_branch
          %984 = sbr.rel (%p982) target = $region40
        $region39: #{spotlight_forward.3} parent=35 // pred_region
          %s985 = sand.u32 %s91, 1
          %s986 = scalar_lea.sflag [#allocation3], %s985
          %s987 = sand.u32 %s91, 1
          %s988 = smul.addr %s987, 64
          %s989 = scalar_lea.vmem [#allocation2], %s988
          %990 = dma.done %s986, 1024
        $region40: #{spotlight_forward.3} parent=35 // pred_fallthru
          _
      $region36: #{spotlight_forward.3} parent=5 // pred_fallthru
        _
    $region6: #{spotlight_forward.3} parent=1 // loop_footer
      %s15 = sadd.s32 1, %s11
    $region7: #{spotlight_forward.3} parent=1 // loop_footer_branch
      %10 = sbr.rel target = $region3
    $region8: #{spotlight_forward.3} parent=1 // loop_exit
      _
    %991 = vsyncpa [#allocation3], 1
    %s992 = scalar_lea.sflag [#allocation3], 1
    %993 = vsyncpa %s992, 1

// kernel: spotlight_forward.2
$region0: #{spotlight_forward.2}
  #allocation0 [shape = 'u32[]', space=smem, size = 0x4, offset = 0x4, fixed_abs, tag = 'smem constant byte address 0x4 - core index']
  #allocation1 [shape = 'u32[144,128]{1,0:T(1,128)}', space=vmem, size = 0x12000, scoped, tag = 'internal scratch']
  %s0 = inlined_call_operand.vmem [shape: f32[128,32], index: 0, kind: input, shape index: {}]
  %s1 = inlined_call_operand.vmem [shape: f32[32,256], index: 1, kind: input, shape index: {}]
  %s2 = inlined_call_operand.hbm [shape: f32[128,256], index: 2, kind: output, shape index: {}]
  %s3 = sld [smem:[#allocation0]]
  $region41: #{spotlight_forward.2} parent=0
    _
  %s5 = ssub.s32 1, %s3
  %s6 = scalar_select 0, %s5, %s3
  $region1: #{spotlight_forward.2} parent=0
    #allocation2 [shape = 'u8[131072]{0}', space=vmem, size = 0x20000, scoped, tag = 'output window, operand 0']
    #allocation3 [shape = 's32[2]{0}', space=sflag, size = 0x8, scoped, tag = 'scoped memory for spotlight_forward.2']
    %7 = vsyncpa [#allocation3], 0
    %s8 = scalar_lea.sflag [#allocation3], 1
    %9 = vsyncpa %s8, 0
    loop: start=0, step=1, limit=4
    $region2: #{spotlight_forward.2} parent=1 // loop_pre_header
      _
    $region3: #{spotlight_forward.2} parent=1 // loop_header
      %s11 = sphi 0, %s15
      %p12 = scmp.ge.s32.totalorder %s11, 4
      %s18 = sphi 0, %s30
      %s19 = sphi 0, %s26
      %s20 = sphi 0, %s18
      %s21 = sphi 0, %s19
      %s22 = sphi 0, %s20
      %s23 = sphi 0, %s21
      %s33 = sphi 0, %s35
      %s36 = sphi 0, %s33
      %s37 = sphi 0, %s36
      %s53 = sphi 0, %s37
      %s59 = sphi 0, %s61
      %s62 = sphi 0, %s59
      %s63 = sphi 0, %s62
      %s79 = sphi 0, %s63
      %s87 = sphi 0, %s89
      %s90 = sphi 0, %s87
      %s91 = sphi 0, %s90
      %s107 = sphi 0, %s91
    $region4: #{spotlight_forward.2} parent=1 // loop_header_branch
      %14 = sbr.rel (%p12) target = $region8
    $region5: #{spotlight_forward.2} parent=1 // loop_body
      %s16 = ssub.s32 %s11, 1
      %s17 = ssub.s32 %s11, 2
      %s24 = sadd.s32 1, %s19
      %p25 = scmp.ge.s32.totalorder %s24, 2
      %s26 = scalar_select %p25, 0, %s24
      %s27 = sadd.s32 1, %s18
      %s28 = scalar_select %p25, %s27, %s18
      %p29 = scmp.ge.s32.totalorder %s28, 1
      %s30 = scalar_select %p29, 0, %s28
      %s31 = ssub.s32 %s19, %s26
      %p32 = scmp.eq.s32.totalorder %s31, 0
      %s34 = sadd.s32 %s33, 1
      %s35 = scalar_select %p32, %s33, %s34
      %p38 = pneg %p32
      %p39 = scmp.eq.s32.totalorder %s11, 1
      %p40 = por %p38, %p39
      %p41 = scmp.ne.s32.totalorder %s33, %s36
      %p42 = scmp.eq.s32.totalorder %s11, 0
      %p43 = por %p41, %p42
      %p44 = scmp.ne.s32.totalorder %s33, %s36
      %p45 = scmp.eq.s32.totalorder %s16, 1
      %p46 = por %p44, %p45
      %p47 = scmp.ne.s32.totalorder %s36, %s37
      %p48 = scmp.eq.s32.totalorder %s16, 0
      %p49 = por %p47, %p48
      %p50 = scmp.ne.s32.totalorder %s36, %s37
      %p51 = scmp.eq.s32.totalorder %s17, 1
      %p52 = por %p50, %p51
      %p54 = scmp.ne.s32.totalorder %s37, %s53
      %p55 = scmp.eq.s32.totalorder %s17, 0
      %p56 = por %p54, %p55
      %s57 = ssub.s32 %s18, %s30
      %p58 = scmp.eq.s32.totalorder %s57, 0
      %s60 = sadd.s32 %s59, 1
      %s61 = scalar_select %p58, %s59, %s60
      %p64 = pneg %p58
      %p65 = scmp.eq.s32.totalorder %s11, 1
      %p66 = por %p64, %p65
      %p67 = scmp.ne.s32.totalorder %s59, %s62
      %p68 = scmp.eq.s32.totalorder %s11, 0
      %p69 = por %p67, %p68
      %p70 = scmp.ne.s32.totalorder %s59, %s62
      %p71 = scmp.eq.s32.totalorder %s16, 1
      %p72 = por %p70, %p71
      %p73 = scmp.ne.s32.totalorder %s62, %s63
      %p74 = scmp.eq.s32.totalorder %s16, 0
      %p75 = por %p73, %p74
      %p76 = scmp.ne.s32.totalorder %s62, %s63
      %p77 = scmp.eq.s32.totalorder %s17, 1
      %p78 = por %p76, %p77
      %p80 = scmp.ne.s32.totalorder %s63, %s79
      %p81 = scmp.eq.s32.totalorder %s17, 0
      %p82 = por %p80, %p81
      %s83 = ssub.s32 %s19, %s26
      %s84 = ssub.s32 %s18, %s30
      %s85 = sor.u32 %s83, %s84
      %p86 = scmp.eq.s32.totalorder %s85, 0
      %s88 = sadd.s32 %s87, 1
      %s89 = scalar_select %p86, %s87, %s88
      %p92 = pneg %p86
      %p93 = scmp.eq.s32.totalorder %s11, 1
      %p94 = por %p92, %p93
      %p95 = scmp.ne.s32.totalorder %s87, %s90
      %p96 = scmp.eq.s32.totalorder %s11, 0
      %p97 = por %p95, %p96
      %p98 = scmp.ne.s32.totalorder %s87, %s90
      %p99 = scmp.eq.s32.totalorder %s16, 1
      %p100 = por %p98, %p99
      %p101 = scmp.ne.s32.totalorder %s90, %s91
      %p102 = scmp.eq.s32.totalorder %s16, 0
      %p103 = por %p101, %p102
      %p104 = scmp.ne.s32.totalorder %s90, %s91
      %p105 = scmp.eq.s32.totalorder %s17, 1
      %p106 = por %p104, %p105
      %p108 = scmp.ne.s32.totalorder %s91, %s107
      %p109 = scmp.eq.s32.totalorder %s17, 0
      %p110 = por %p108, %p109
      %p111 = scmp.le.s32.totalorder 1, %s11
      %p112 = scmp.lt.s32.totalorder %s11, 3
      %p113 = pnand %p111, %p112
      %p114 = pneg %p113
      // Predicated region
      $region9: #{spotlight_forward.2} parent=5 // pred_check
        _
      $region10: #{spotlight_forward.2} parent=5 // pred_check_branch
        %116 = sbr.rel (%p113) target = $region12
      $region11: #{spotlight_forward.2} parent=5 // pred_region
        %s117 = ssub.s32 %s11, 1
        // Predicated region
        $region13: #{spotlight_forward.2} parent=11 // pred_check
          %p118 = pneg %p75
        $region14: #{spotlight_forward.2} parent=11 // pred_check_branch
          %120 = sbr.rel (%p118) target = $region16
        $region15: #{spotlight_forward.2} parent=11 // pred_region
          %s121 = smul.u32 2, %s20
          %p122 = scmp.lt.s32.totalorder %s121, 1
          %s123 = scalar_select %p122, %s121, 1
          %s124 = smul.addr %s123, 8
          %s125 = scalar_lea.vmem %s1, %s124
          %s126 = smul.u32 2, %s20
        $region16: #{spotlight_forward.2} parent=11 // pred_fallthru
          _
      $region12: #{spotlight_forward.2} parent=5 // pred_fallthru
        _
      %p127 = scmp.lt.s32.totalorder %s11, 2
      // Predicated region
      $region17: #{spotlight_forward.2} parent=5 // pred_check
        %p128 = pneg %p127
      $region18: #{spotlight_forward.2} parent=5 // pred_check_branch
        %130 = sbr.rel (%p128) target = $region20
      $region19: #{spotlight_forward.2} parent=5 // pred_region
        // Predicated region
        $region21: #{spotlight_forward.2} parent=19 // pred_check
          %p131 = pneg %p43
        $region22: #{spotlight_forward.2} parent=19 // pred_check_branch
          %133 = sbr.rel (%p131) target = $region24
        $region23: #{spotlight_forward.2} parent=19 // pred_region
          %s134 = smul.u32 8, %s19
          %p135 = scmp.lt.s32.totalorder %s134, 15
          %s136 = scalar_select %p135, %s134, 15
          %s137 = smul.addr %s136, 8
          %s138 = scalar_lea.vmem %s0, %s137
          %s139 = smul.u32 8, %s19
        $region24: #{spotlight_forward.2} parent=19 // pred_fallthru
          _
      $region20: #{spotlight_forward.2} parent=5 // pred_fallthru
        _
      %p140 = scmp.le.s32.totalorder 1, %s11
      %p141 = scmp.lt.s32.totalorder %s11, 3
      %p142 = pnand %p140, %p141
      %p143 = pneg %p142
      // Predicated region
      $region25: #{spotlight_forward.2} parent=5 // pred_check
        _
      $region26: #{spotlight_forward.2} parent=5 // pred_check_branch
        %145 = sbr.rel (%p142) target = $region28
      $region27: #{spotlight_forward.2} parent=5 // pred_region
        %s146 = ssub.s32 %s11, 1
        %s147 = smul.u32 8, %s21
        %p148 = scmp.lt.s32.totalorder %s147, 15
        %s149 = scalar_select %p148, %s147, 15
        %s150 = smul.addr %s149, 8
        %s151 = scalar_lea.vmem %s0, %s150
        %p152 = pneg %p49
        %p153 = pneg %p46
        %s154 = smul.u32 2, %s20
        %p155 = scmp.lt.s32.totalorder %s154, 1
        %s156 = scalar_select %p155, %s154, 1
        %s157 = smul.addr %s156, 8
        %s158 = scalar_lea.vmem %s1, %s157
        %p159 = pneg %p75
        %p160 = pneg %p72
        %p161 = pneg %p103
        %p162 = pneg %p100
        %s163 = sand.u32 %s90, 1
        %s164 = scalar_lea.sflag [#allocation3], %s163
        %s165 = sand.u32 %s90, 1
        %s166 = smul.addr %s165, 128
        %s167 = scalar_lea.vmem [#allocation2], %s166
        %s168 = smul.u32 8, %s21
        %p169 = scmp.lt.s32.totalorder %s168, 15
        %s170 = scalar_select %p169, %s168, 15
        %s171 = smul.addr %s170, 8
        %s172 = scalar_lea.vmem %s0, %s171
        %s173 = smul.u32 8, %s21
        %s174 = smul.u32 2, %s20
        %p175 = scmp.lt.s32.totalorder %s174, 1
        %s176 = scalar_select %p175, %s174, 1
        %s177 = smul.addr %s176, 8
        %s178 = scalar_lea.vmem %s1, %s177
        %s179 = smul.u32 2, %s20
        %s180 = smul.u32 8, %s21
        %s181 = smul.u32 2, %s20
        %v182 = vld [vmem:[%s172] sm:$0xff]
        %v183 = vld [vmem:[%s172 + $0x8] sm:$0xff]
        %v184 = vld [vmem:[%s172 + $0x10] sm:$0xff]
        %v185 = vld [vmem:[%s172 + $0x18] sm:$0xff]
        %v186 = vld [vmem:[%s172 + $0x20] sm:$0xff]
        %v187 = vld [vmem:[%s172 + $0x28] sm:$0xff]
        %v188 = vld [vmem:[%s172 + $0x30] sm:$0xff]
        %v189 = vld [vmem:[%s172 + $0x38] sm:$0xff]
        %v190 = vld [vmem:[%s178] sm:$0xff]
        %v191 = vld [vmem:[%s178 + $0x8] sm:$0xff]
        %v192 = vld [vmem:[%s178 + $0x10] sm:$0xff]
        %v193 = vld [vmem:[%s178 + $0x18] sm:$0xff]
        %v194 = vld [vmem:[%s178 + $0x20] sm:$0xff]
        %v195 = vld [vmem:[%s178 + $0x28] sm:$0xff]
        %v196 = vld [vmem:[%s178 + $0x30] sm:$0xff]
        %v197 = vld [vmem:[%s178 + $0x38] sm:$0xff]
        %v198 = vxor.u32 %v190, 2147483648
        %v199 = vxor.u32 %v191, 2147483648
        %v200 = vxor.u32 %v192, 2147483648
        %v201 = vxor.u32 %v193, 2147483648
        %v202 = vxor.u32 %v194, 2147483648
        %v203 = vxor.u32 %v195, 2147483648
        %v204 = vxor.u32 %v196, 2147483648
        %v205 = vxor.u32 %v197, 2147483648
        %v206 = vmul.f32 %v198, 1.442695
        %v207 = vpow.pop %v206
        %v208 = vmul.f32 %v199, 1.442695
        %v209 = vpow.pop %v208
        %v210 = vmul.f32 %v200, 1.442695
        %v211 = vpow.pop %v210
        %v212 = vmul.f32 %v201, 1.442695
        %v213 = vpow.pop %v212
        %v214 = vmul.f32 %v202, 1.442695
        %v215 = vpow.pop %v214
        %v216 = vmul.f32 %v203, 1.442695
        %v217 = vpow.pop %v216
        %v218 = vmul.f32 %v204, 1.442695
        %v219 = vpow.pop %v218
        %v220 = vmul.f32 %v205, 1.442695
        %v221 = vpow.pop %v220
        %v222 = vadd.f32 %v207, 1.0
        %v223 = vadd.f32 %v209, 1.0
        %v224 = vadd.f32 %v211, 1.0
        %v225 = vadd.f32 %v213, 1.0
        %v226 = vadd.f32 %v215, 1.0
        %v227 = vadd.f32 %v217, 1.0
        %v228 = vadd.f32 %v219, 1.0
        %v229 = vadd.f32 %v221, 1.0
        %v230 = vrcp.pop %v222
        %v231 = vmul.f32 1.0, %v230
        %v232 = vrcp.pop %v223
        %v233 = vmul.f32 1.0, %v232
        %v234 = vrcp.pop %v224
        %v235 = vmul.f32 1.0, %v234
        %v236 = vrcp.pop %v225
        %v237 = vmul.f32 1.0, %v236
        %v238 = vrcp.pop %v226
        %v239 = vmul.f32 1.0, %v238
        %v240 = vrcp.pop %v227
        %v241 = vmul.f32 1.0, %v240
        %v242 = vrcp.pop %v228
        %v243 = vmul.f32 1.0, %v242
        %v244 = vrcp.pop %v229
        %v245 = vmul.f32 1.0, %v244
        %vm246 = vcmask 261120
        %v248 = vsel %vm246, %v182, 0
        %v251 = vsel %vm246, %v183, 0
        %v254 = vsel %vm246, %v184, 0
        %v257 = vsel %vm246, %v185, 0
        %v260 = vsel %vm246, %v186, 0
        %v263 = vsel %vm246, %v187, 0
        %v266 = vsel %vm246, %v188, 0
        %v269 = vsel %vm246, %v189, 0
        %v271 = vand.u32 %v233, 4294901760
        %272 = vmatprep.subr.mxu0 %v271
        %v273 = vand.u32 %v231, 4294901760
        %274 = vmatpush1.msra.mxu0 %v273
        %v275 = vand.u32 %v237, 4294901760
        %276 = vmatprep.subr.mxu0 %v275
        %v277 = vand.u32 %v235, 4294901760
        %278 = vmatpush1.msra.mxu0 %v277
        %v279 = vand.u32 %v241, 4294901760
        %280 = vmatprep.subr.mxu0 %v279
        %v281 = vand.u32 %v239, 4294901760
        %282 = vmatpush1.msra.mxu0 %v281
        %v283 = vand.u32 %v245, 4294901760
        %284 = vmatprep.subr.mxu0 %v283
        %v285 = vand.u32 %v243, 4294901760
        %286 = vmatpush1.msra.mxu0 %v285
        %287 = vmatprep.subr.mxu0 0.0
        %288 = vmatpush1.msra.mxu0 0.0
        %289 = vmatprep.subr.mxu0 0.0
        %290 = vmatpush1.msra.mxu0 0.0
        %291 = vmatprep.subr.mxu0 0.0
        %292 = vmatpush1.msra.mxu0 0.0
        %293 = vmatprep.subr.mxu0 0.0
        %294 = vmatpush1.msra.mxu0 0.0
        %295 = vmatprep.subr.mxu0 0.0
        %296 = vmatpush1.msra.mxu0 0.0
        %297 = vmatprep.subr.mxu0 0.0
        %298 = vmatpush1.msra.mxu0 0.0
        %299 = vmatprep.subr.mxu0 0.0
        %300 = vmatpush1.msra.mxu0 0.0
        %301 = vmatprep.subr.mxu0 0.0
        %302 = vmatpush1.msra.mxu0 0.0
        %303 = vmatprep.subr.mxu0 0.0
        %304 = vmatpush1.msra.mxu0 0.0
        %305 = vmatprep.subr.mxu0 0.0
        %306 = vmatpush1.msra.mxu0 0.0
        %307 = vmatprep.subr.mxu0 0.0
        %308 = vmatpush1.msra.mxu0 0.0
        %309 = vmatprep.subr.mxu0 0.0
        %310 = vmatpush1.msra.mxu0 0.0
        %311 = vmatprep.subr.mxu0 0.0
        %312 = vmatpush1.msra.mxu0 0.0
        %313 = vmatprep.subr.mxu0 0.0
        %314 = vmatpush1.msra.mxu0 0.0
        %315 = vmatprep.subr.mxu0 0.0
        %316 = vmatpush1.msra.mxu0 0.0
        %317 = vmatprep.subr.mxu0 0.0
        %318 = vmatpush1.msra.mxu0 0.0
        %319 = vmatprep.subr.mxu0 0.0
        %320 = vmatpush1.msra.mxu0 0.0
        %321 = vmatprep.subr.mxu0 0.0
        %322 = vmatpush1.msra.mxu0 0.0
        %323 = vmatprep.subr.mxu0 0.0
        %324 = vmatpush1.msra.mxu0 0.0
        %325 = vmatprep.subr.mxu0 0.0
        %326 = vmatpush1.msra.mxu0 0.0
        %327 = vmatprep.subr.mxu0 0.0
        %328 = vmatpush1.msra.mxu0 0.0
        %329 = vmatprep.subr.mxu0 0.0
        %330 = vmatpush1.msra.mxu0 0.0
        %331 = vmatprep.subr.mxu0 0.0
        %332 = vmatpush1.msra.mxu0 0.0
        %333 = vmatprep.subr.mxu0 0.0
        %334 = vmatpush1.msra.mxu0 0.0
        %335 = vmatprep.subr.mxu0 0.0
        %336 = vmatpush1.msra.mxu0 0.0
        %337 = vmatprep.subr.mxu0 0.0
        %338 = vmatpush1.msra.mxu0 0.0
        %339 = vmatprep.subr.mxu0 0.0
        %340 = vmatpush1.msra.mxu0 0.0
        %341 = vmatprep.subr.mxu0 0.0
        %342 = vmatpush1.msra.mxu0 0.0
        %343 = vmatprep.mubr.f32.mxu0 0.0
        %v344 = vand.u32 %v248, 4294901760
        %v345 = vsub.f32 %v248, %v344
        %v346 = vand.u32 %v345, 4294901760
        %v347 = vsub.f32 %v345, %v346
        %v348 = vand.u32 %v347, 4294901760
        %349 = vmatmul.mubr.f32.gmra.mrb[0].mxu0 %v348
        %v350 = vpop.f32.mrb[0].mxu0
        %v351 = vadd.f32 0.0, %v350
        %v352 = vpop.f32.mrb[0].mxu0
        %v353 = vadd.f32 0.0, %v352
        %354 = vmatprep.mubr.f32.mxu0 0.0
        %v355 = vand.u32 %v251, 4294901760
        %v356 = vsub.f32 %v251, %v355
        %v357 = vand.u32 %v356, 4294901760
        %v358 = vsub.f32 %v356, %v357
        %v359 = vand.u32 %v358, 4294901760
        %360 = vmatmul.mubr.f32.gmra.mrb[0].mxu0 %v359
        %v361 = vpop.f32.mrb[0].mxu0
        %v362 = vadd.f32 0.0, %v361
        %v363 = vpop.f32.mrb[0].mxu0
        %v364 = vadd.f32 0.0, %v363
        %365 = vmatprep.mubr.f32.mxu0 0.0
        %v366 = vand.u32 %v254, 4294901760
        %v367 = vsub.f32 %v254, %v366
        %v368 = vand.u32 %v367, 4294901760
        %v369 = vsub.f32 %v367, %v368
        %v370 = vand.u32 %v369, 4294901760
        %371 = vmatmul.mubr.f32.gmra.mrb[0].mxu0 %v370
        %v372 = vpop.f32.mrb[0].mxu0
        %v373 = vadd.f32 0.0, %v372
        %v374 = vpop.f32.mrb[0].mxu0
        %v375 = vadd.f32 0.0, %v374
        %376 = vmatprep.mubr.f32.mxu0 0.0
        %v377 = vand.u32 %v257, 4294901760
        %v378 = vsub.f32 %v257, %v377
        %v379 = vand.u32 %v378, 4294901760
        %v380 = vsub.f32 %v378, %v379
        %v381 = vand.u32 %v380, 4294901760
        %382 = vmatmul.mubr.f32.gmra.mrb[0].mxu0 %v381
        %v383 = vpop.f32.mrb[0].mxu0
        %v384 = vadd.f32 0.0, %v383
        %v385 = vpop.f32.mrb[0].mxu0
        %v386 = vadd.f32 0.0, %v385
        %387 = vmatprep.mubr.f32.mxu0 0.0
        %v388 = vand.u32 %v260, 4294901760
        %v389 = vsub.f32 %v260, %v388
        %v390 = vand.u32 %v389, 4294901760
        %v391 = vsub.f32 %v389, %v390
        %v392 = vand.u32 %v391, 4294901760
        %393 = vmatmul.mubr.f32.gmra.mrb[0].mxu0 %v392
        %v394 = vpop.f32.mrb[0].mxu0
        %v395 = vadd.f32 0.0, %v394
        %v396 = vpop.f32.mrb[0].mxu0
        %v397 = vadd.f32 0.0, %v396
        %398 = vmatprep.mubr.f32.mxu0 0.0
        %v399 = vand.u32 %v263, 4294901760
        %v400 = vsub.f32 %v263, %v399
        %v401 = vand.u32 %v400, 4294901760
        %v402 = vsub.f32 %v400, %v401
        %v403 = vand.u32 %v402, 4294901760
        %404 = vmatmul.mubr.f32.gmra.mrb[0].mxu0 %v403
        %v405 = vpop.f32.mrb[0].mxu0
        %v406 = vadd.f32 0.0, %v405
        %v407 = vpop.f32.mrb[0].mxu0
        %v408 = vadd.f32 0.0, %v407
        %409 = vmatprep.mubr.f32.mxu0 0.0
        %v410 = vand.u32 %v266, 4294901760
        %v411 = vsub.f32 %v266, %v410
        %v412 = vand.u32 %v411, 4294901760
        %v413 = vsub.f32 %v411, %v412
        %v414 = vand.u32 %v413, 4294901760
        %415 = vmatmul.mubr.f32.gmra.mrb[0].mxu0 %v414
        %v416 = vpop.f32.mrb[0].mxu0
        %v417 = vadd.f32 0.0, %v416
        %v418 = vpop.f32.mrb[0].mxu0
        %v419 = vadd.f32 0.0, %v418
        %420 = vmatprep.mubr.f32.mxu0 0.0
        %v421 = vand.u32 %v269, 4294901760
        %v422 = vsub.f32 %v269, %v421
        %v423 = vand.u32 %v422, 4294901760
        %v424 = vsub.f32 %v422, %v423
        %v425 = vand.u32 %v424, 4294901760
        %426 = vmatmul.mubr.f32.gmra.mrb[0].mxu0 %v425
        %v427 = vpop.f32.mrb[0].mxu0
        %v428 = vadd.f32 0.0, %v427
        %v429 = vpop.f32.mrb[0].mxu0
        %v430 = vadd.f32 0.0, %v429
        %431 = vdwg.mxu0
        %v432 = vand.u32 %v233, 4294901760
        %v433 = vsub.f32 %v233, %v432
        %v434 = vand.u32 %v433, 4294901760
        %v435 = vsub.f32 %v433, %v434
        %v436 = vand.u32 %v435, 4294901760
        %437 = vmatprep.subr.mxu0 %v436
        %v438 = vand.u32 %v231, 4294901760
        %v439 = vsub.f32 %v231, %v438
        %v440 = vand.u32 %v439, 4294901760
        %v441 = vsub.f32 %v439, %v440
        %v442 = vand.u32 %v441, 4294901760
        %443 = vmatpush1.msra.mxu0 %v442
        %v444 = vand.u32 %v237, 4294901760
        %v445 = vsub.f32 %v237, %v444
        %v446 = vand.u32 %v445, 4294901760
        %v447 = vsub.f32 %v445, %v446
        %v448 = vand.u32 %v447, 4294901760
        %449 = vmatprep.subr.mxu0 %v448
        %v450 = vand.u32 %v235, 4294901760
        %v451 = vsub.f32 %v235, %v450
        %v452 = vand.u32 %v451, 4294901760
        %v453 = vsub.f32 %v451, %v452
        %v454 = vand.u32 %v453, 4294901760
        %455 = vmatpush1.msra.mxu0 %v454
        %v456 = vand.u32 %v241, 4294901760
        %v457 = vsub.f32 %v241, %v456
        %v458 = vand.u32 %v457, 4294901760
        %v459 = vsub.f32 %v457, %v458
        %v460 = vand.u32 %v459, 4294901760
        %461 = vmatprep.subr.mxu0 %v460
        %v462 = vand.u32 %v239, 4294901760
        %v463 = vsub.f32 %v239, %v462
        %v464 = vand.u32 %v463, 4294901760
        %v465 = vsub.f32 %v463, %v464
        %v466 = vand.u32 %v465, 4294901760
        %467 = vmatpush1.msra.mxu0 %v466
        %v468 = vand.u32 %v245, 4294901760
        %v469 = vsub.f32 %v245, %v468
        %v470 = vand.u32 %v469, 4294901760
        %v471 = vsub.f32 %v469, %v470
        %v472 = vand.u32 %v471, 4294901760
        %473 = vmatprep.subr.mxu0 %v472
        %v474 = vand.u32 %v243, 4294901760
        %v475 = vsub.f32 %v243, %v474
        %v476 = vand.u32 %v475, 4294901760
        %v477 = vsub.f32 %v475, %v476
        %v478 = vand.u32 %v477, 4294901760
        %479 = vmatpush1.msra.mxu0 %v478
        %480 = vmatprep.subr.mxu0 0.0
        %481 = vmatpush1.msra.mxu0 0.0
        %482 = vmatprep.subr.mxu0 0.0
        %483 = vmatpush1.msra.mxu0 0.0
        %484 = vmatprep.subr.mxu0 0.0
        %485 = vmatpush1.msra.mxu0 0.0
        %486 = vmatprep.subr.mxu0 0.0
        %487 = vmatpush1.msra.mxu0 0.0
        %488 = vmatprep.subr.mxu0 0.0
        %489 = vmatpush1.msra.mxu0 0.0
        %490 = vmatprep.subr.mxu0 0.0
        %491 = vmatpush1.msra.mxu0 0.0
        %492 = vmatprep.subr.mxu0 0.0
        %493 = vmatpush1.msra.mxu0 0.0
        %494 = vmatprep.subr.mxu0 0.0
        %495 = vmatpush1.msra.mxu0 0.0
        %496 = vmatprep.subr.mxu0 0.0
        %497 = vmatpush1.msra.mxu0 0.0
        %498 = vmatprep.subr.mxu0 0.0
        %499 = vmatpush1.msra.mxu0 0.0
        %500 = vmatprep.subr.mxu0 0.0
        %501 = vmatpush1.msra.mxu0 0.0
        %502 = vmatprep.subr.mxu0 0.0
        %503 = vmatpush1.msra.mxu0 0.0
        %504 = vmatprep.subr.mxu0 0.0
        %505 = vmatpush1.msra.mxu0 0.0
        %506 = vmatprep.subr.mxu0 0.0
        %507 = vmatpush1.msra.mxu0 0.0
        %508 = vmatprep.subr.mxu0 0.0
        %509 = vmatpush1.msra.mxu0 0.0
        %510 = vmatprep.subr.mxu0 0.0
        %511 = vmatpush1.msra.mxu0 0.0
        %512 = vmatprep.subr.mxu0 0.0
        %513 = vmatpush1.msra.mxu0 0.0
        %514 = vmatprep.subr.mxu0 0.0
        %515 = vmatpush1.msra.mxu0 0.0
        %516 = vmatprep.subr.mxu0 0.0
        %517 = vmatpush1.msra.mxu0 0.0
        %518 = vmatprep.subr.mxu0 0.0
        %519 = vmatpush1.msra.mxu0 0.0
        %520 = vmatprep.subr.mxu0 0.0
        %521 = vmatpush1.msra.mxu0 0.0
        %522 = vmatprep.subr.mxu0 0.0
        %523 = vmatpush1.msra.mxu0 0.0
        %524 = vmatprep.subr.mxu0 0.0
        %525 = vmatpush1.msra.mxu0 0.0
        %526 = vmatprep.subr.mxu0 0.0
        %527 = vmatpush1.msra.mxu0 0.0
        %528 = vmatprep.subr.mxu0 0.0
        %529 = vmatpush1.msra.mxu0 0.0
        %530 = vmatprep.subr.mxu0 0.0
        %531 = vmatpush1.msra.mxu0 0.0
        %532 = vmatprep.subr.mxu0 0.0
        %533 = vmatpush1.msra.mxu0 0.0
        %534 = vmatprep.subr.mxu0 0.0
        %535 = vmatpush1.msra.mxu0 0.0
        %536 = vmatprep.mubr.f32.mxu0 0.0
        %v537 = vand.u32 %v248, 4294901760
        %538 = vmatmul.mubr.f32.gmra.mrb[0].mxu0 %v537
        %v539 = vpop.f32.mrb[0].mxu0
        %v540 = vadd.f32 %v351, %v539
        %v541 = vpop.f32.mrb[0].mxu0
        %v542 = vadd.f32 %v353, %v541
        %543 = vmatprep.mubr.f32.mxu0 0.0
        %v544 = vand.u32 %v251, 4294901760
        %545 = vmatmul.mubr.f32.gmra.mrb[0].mxu0 %v544
        %v546 = vpop.f32.mrb[0].mxu0
        %v547 = vadd.f32 %v362, %v546
        %v548 = vpop.f32.mrb[0].mxu0
        %v549 = vadd.f32 %v364, %v548
        %550 = vmatprep.mubr.f32.mxu0 0.0
        %v551 = vand.u32 %v254, 4294901760
        %552 = vmatmul.mubr.f32.gmra.mrb[0].mxu0 %v551
        %v553 = vpop.f32.mrb[0].mxu0
        %v554 = vadd.f32 %v373, %v553
        %v555 = vpop.f32.mrb[0].mxu0
        %v556 = vadd.f32 %v375, %v555
        %557 = vmatprep.mubr.f32.mxu0 0.0
        %v558 = vand.u32 %v257, 4294901760
        %559 = vmatmul.mubr.f32.gmra.mrb[0].mxu0 %v558
        %v560 = vpop.f32.mrb[0].mxu0
        %v561 = vadd.f32 %v384, %v560
        %v562 = vpop.f32.mrb[0].mxu0
        %v563 = vadd.f32 %v386, %v562
        %564 = vmatprep.mubr.f32.mxu0 0.0
        %v565 = vand.u32 %v260, 4294901760
        %566 = vmatmul.mubr.f32.gmra.mrb[0].mxu0 %v565
        %v567 = vpop.f32.mrb[0].mxu0
        %v568 = vadd.f32 %v395, %v567
        %v569 = vpop.f32.mrb[0].mxu0
        %v570 = vadd.f32 %v397, %v569
        %571 = vmatprep.mubr.f32.mxu0 0.0
        %v572 = vand.u32 %v263, 4294901760
        %573 = vmatmul.mubr.f32.gmra.mrb[0].mxu0 %v572
        %v574 = vpop.f32.mrb[0].mxu0
        %v575 = vadd.f32 %v406, %v574
        %v576 = vpop.f32.mrb[0].mxu0
        %v577 = vadd.f32 %v408, %v576
        %578 = vmatprep.mubr.f32.mxu0 0.0
        %v579 = vand.u32 %v266, 4294901760
        %580 = vmatmul.mubr.f32.gmra.mrb[0].mxu0 %v579
        %v581 = vpop.f32.mrb[0].mxu0
        %v582 = vadd.f32 %v417, %v581
        %v583 = vpop.f32.mrb[0].mxu0
        %v584 = vadd.f32 %v419, %v583
        %585 = vmatprep.mubr.f32.mxu0 0.0
        %v586 = vand.u32 %v269, 4294901760
        %587 = vmatmul.mubr.f32.gmra.mrb[0].mxu0 %v586
        %v588 = vpop.f32.mrb[0].mxu0
        %v589 = vadd.f32 %v428, %v588
        %v590 = vpop.f32.mrb[0].mxu0
        %v591 = vadd.f32 %v430, %v590
        %592 = vdwg.mxu0
        %v593 = vand.u32 %v233, 4294901760
        %v594 = vsub.f32 %v233, %v593
        %595 = vmatprep.subr.mxu0 %v594
        %v596 = vand.u32 %v231, 4294901760
        %v597 = vsub.f32 %v231, %v596
        %598 = vmatpush1.msra.mxu0 %v597
        %v599 = vand.u32 %v237, 4294901760
        %v600 = vsub.f32 %v237, %v599
        %601 = vmatprep.subr.mxu0 %v600
        %v602 = vand.u32 %v235, 4294901760
        %v603 = vsub.f32 %v235, %v602
        %604 = vmatpush1.msra.mxu0 %v603
        %v605 = vand.u32 %v241, 4294901760
        %v606 = vsub.f32 %v241, %v605
        %607 = vmatprep.subr.mxu0 %v606
        %v608 = vand.u32 %v239, 4294901760
        %v609 = vsub.f32 %v239, %v608
        %610 = vmatpush1.msra.mxu0 %v609
        %v611 = vand.u32 %v245, 4294901760
        %v612 = vsub.f32 %v245, %v611
        %613 = vmatprep.subr.mxu0 %v612
        %v614 = vand.u32 %v243, 4294901760
        %v615 = vsub.f32 %v243, %v614
        %616 = vmatpush1.msra.mxu0 %v615
        %617 = vmatprep.subr.mxu0 0.0
        %618 = vmatpush1.msra.mxu0 0.0
        %619 = vmatprep.subr.mxu0 0.0
        %620 = vmatpush1.msra.mxu0 0.0
        %621 = vmatprep.subr.mxu0 0.0
        %622 = vmatpush1.msra.mxu0 0.0
        %623 = vmatprep.subr.mxu0 0.0
        %624 = vmatpush1.msra.mxu0 0.0
        %625 = vmatprep.subr.mxu0 0.0
        %626 = vmatpush1.msra.mxu0 0.0
        %627 = vmatprep.subr.mxu0 0.0
        %628 = vmatpush1.msra.mxu0 0.0
        %629 = vmatprep.subr.mxu0 0.0
        %630 = vmatpush1.msra.mxu0 0.0
        %631 = vmatprep.subr.mxu0 0.0
        %632 = vmatpush1.msra.mxu0 0.0
        %633 = vmatprep.subr.mxu0 0.0
        %634 = vmatpush1.msra.mxu0 0.0
        %635 = vmatprep.subr.mxu0 0.0
        %636 = vmatpush1.msra.mxu0 0.0
        %637 = vmatprep.subr.mxu0 0.0
        %638 = vmatpush1.msra.mxu0 0.0
        %639 = vmatprep.subr.mxu0 0.0
        %640 = vmatpush1.msra.mxu0 0.0
        %641 = vmatprep.subr.mxu0 0.0
        %642 = vmatpush1.msra.mxu0 0.0
        %643 = vmatprep.subr.mxu0 0.0
        %644 = vmatpush1.msra.mxu0 0.0
        %645 = vmatprep.subr.mxu0 0.0
        %646 = vmatpush1.msra.mxu0 0.0
        %647 = vmatprep.subr.mxu0 0.0
        %648 = vmatpush1.msra.mxu0 0.0
        %649 = vmatprep.subr.mxu0 0.0
        %650 = vmatpush1.msra.mxu0 0.0
        %651 = vmatprep.subr.mxu0 0.0
        %652 = vmatpush1.msra.mxu0 0.0
        %653 = vmatprep.subr.mxu0 0.0
        %654 = vmatpush1.msra.mxu0 0.0
        %655 = vmatprep.subr.mxu0 0.0
        %656 = vmatpush1.msra.mxu0 0.0
        %657 = vmatprep.subr.mxu0 0.0
        %658 = vmatpush1.msra.mxu0 0.0
        %659 = vmatprep.subr.mxu0 0.0
        %660 = vmatpush1.msra.mxu0 0.0
        %661 = vmatprep.subr.mxu0 0.0
        %662 = vmatpush1.msra.mxu0 0.0
        %663 = vmatprep.subr.mxu0 0.0
        %664 = vmatpush1.msra.mxu0 0.0
        %665 = vmatprep.subr.mxu0 0.0
        %666 = vmatpush1.msra.mxu0 0.0
        %667 = vmatprep.subr.mxu0 0.0
        %668 = vmatpush1.msra.mxu0 0.0
        %669 = vmatprep.subr.mxu0 0.0
        %670 = vmatpush1.msra.mxu0 0.0
        %671 = vmatprep.subr.mxu0 0.0
        %672 = vmatpush1.msra.mxu0 0.0
        %673 = vmatprep.mubr.f32.mxu0 0.0
        %v674 = vand.u32 %v248, 4294901760
        %v675 = vsub.f32 %v248, %v674
        %676 = vmatmul.mubr.f32.gmra.mrb[0].mxu0 %v675
        %v677 = vpop.f32.mrb[0].mxu0
        %v678 = vadd.f32 %v540, %v677
        %v679 = vpop.f32.mrb[0].mxu0
        %v680 = vadd.f32 %v542, %v679
        %681 = vmatprep.mubr.f32.mxu0 0.0
        %v682 = vand.u32 %v251, 4294901760
        %v683 = vsub.f32 %v251, %v682
        %684 = vmatmul.mubr.f32.gmra.mrb[0].mxu0 %v683
        %v685 = vpop.f32.mrb[0].mxu0
        %v686 = vadd.f32 %v547, %v685
        %v687 = vpop.f32.mrb[0].mxu0
        %v688 = vadd.f32 %v549, %v687
        %689 = vmatprep.mubr.f32.mxu0 0.0
        %v690 = vand.u32 %v254, 4294901760
        %v691 = vsub.f32 %v254, %v690
        %692 = vmatmul.mubr.f32.gmra.mrb[0].mxu0 %v691
        %v693 = vpop.f32.mrb[0].mxu0
        %v694 = vadd.f32 %v554, %v693
        %v695 = vpop.f32.mrb[0].mxu0
        %v696 = vadd.f32 %v556, %v695
        %697 = vmatprep.mubr.f32.mxu0 0.0
        %v698 = vand.u32 %v257, 4294901760
        %v699 = vsub.f32 %v257, %v698
        %700 = vmatmul.mubr.f32.gmra.mrb[0].mxu0 %v699
        %v701 = vpop.f32.mrb[0].mxu0
        %v702 = vadd.f32 %v561, %v701
        %v703 = vpop.f32.mrb[0].mxu0
        %v704 = vadd.f32 %v563, %v703
        %705 = vmatprep.mubr.f32.mxu0 0.0
        %v706 = vand.u32 %v260, 4294901760
        %v707 = vsub.f32 %v260, %v706
        %708 = vmatmul.mubr.f32.gmra.mrb[0].mxu0 %v707
        %v709 = vpop.f32.mrb[0].mxu0
        %v710 = vadd.f32 %v568, %v709
        %v711 = vpop.f32.mrb[0].mxu0
        %v712 = vadd.f32 %v570, %v711
        %713 = vmatprep.mubr.f32.mxu0 0.0
        %v714 = vand.u32 %v263, 4294901760
        %v715 = vsub.f32 %v263, %v714
        %716 = vmatmul.mubr.f32.gmra.mrb[0].mxu0 %v715
        %v717 = vpop.f32.mrb[0].mxu0
        %v718 = vadd.f32 %v575, %v717
        %v719 = vpop.f32.mrb[0].mxu0
        %v720 = vadd.f32 %v577, %v719
        %721 = vmatprep.mubr.f32.mxu0 0.0
        %v722 = vand.u32 %v266, 4294901760
        %v723 = vsub.f32 %v266, %v722
        %724 = vmatmul.mubr.f32.gmra.mrb[0].mxu0 %v723
        %v725 = vpop.f32.mrb[0].mxu0
        %v726 = vadd.f32 %v582, %v725
        %v727 = vpop.f32.mrb[0].mxu0
        %v728 = vadd.f32 %v584, %v727
        %729 = vmatprep.mubr.f32.mxu0 0.0
        %v730 = vand.u32 %v269, 4294901760
        %v731 = vsub.f32 %v269, %v730
        %732 = vmatmul.mubr.f32.gmra.mrb[0].mxu0 %v731
        %v733 = vpop.f32.mrb[0].mxu0
        %v734 = vadd.f32 %v589, %v733
        %v735 = vpop.f32.mrb[0].mxu0
        %v736 = vadd.f32 %v591, %v735
        %737 = vdwg.mxu0
        %v738 = vand.u32 %v233, 4294901760
        %739 = vmatprep.subr.mxu0 %v738
        %v740 = vand.u32 %v231, 4294901760
        %741 = vmatpush1.msra.mxu0 %v740
        %v742 = vand.u32 %v237, 4294901760
        %743 = vmatprep.subr.mxu0 %v742
        %v744 = vand.u32 %v235, 4294901760
        %745 = vmatpush1.msra.mxu0 %v744
        %v746 = vand.u32 %v241, 4294901760
        %747 = vmatprep.subr.mxu0 %v746
        %v748 = vand.u32 %v239, 4294901760
        %749 = vmatpush1.msra.mxu0 %v748
        %v750 = vand.u32 %v245, 4294901760
        %751 = vmatprep.subr.mxu0 %v750
        %v752 = vand.u32 %v243, 4294901760
        %753 = vmatpush1.msra.mxu0 %v752
        %754 = vmatprep.subr.mxu0 0.0
        %755 = vmatpush1.msra.mxu0 0.0
        %756 = vmatprep.subr.mxu0 0.0
        %757 = vmatpush1.msra.mxu0 0.0
        %758 = vmatprep.subr.mxu0 0.0
        %759 = vmatpush1.msra.mxu0 0.0
        %760 = vmatprep.subr.mxu0 0.0
        %761 = vmatpush1.msra.mxu0 0.0
        %762 = vmatprep.subr.mxu0 0.0
        %763 = vmatpush1.msra.mxu0 0.0
        %764 = vmatprep.subr.mxu0 0.0
        %765 = vmatpush1.msra.mxu0 0.0
        %766 = vmatprep.subr.mxu0 0.0
        %767 = vmatpush1.msra.mxu0 0.0
        %768 = vmatprep.subr.mxu0 0.0
        %769 = vmatpush1.msra.mxu0 0.0
        %770 = vmatprep.subr.mxu0 0.0
        %771 = vmatpush1.msra.mxu0 0.0
        %772 = vmatprep.subr.mxu0 0.0
        %773 = vmatpush1.msra.mxu0 0.0
        %774 = vmatprep.subr.mxu0 0.0
        %775 = vmatpush1.msra.mxu0 0.0
        %776 = vmatprep.subr.mxu0 0.0
        %777 = vmatpush1.msra.mxu0 0.0
        %778 = vmatprep.subr.mxu0 0.0
        %779 = vmatpush1.msra.mxu0 0.0
        %780 = vmatprep.subr.mxu0 0.0
        %781 = vmatpush1.msra.mxu0 0.0
        %782 = vmatprep.subr.mxu0 0.0
        %783 = vmatpush1.msra.mxu0 0.0
        %784 = vmatprep.subr.mxu0 0.0
        %785 = vmatpush1.msra.mxu0 0.0
        %786 = vmatprep.subr.mxu0 0.0
        %787 = vmatpush1.msra.mxu0 0.0
        %788 = vmatprep.subr.mxu0 0.0
        %789 = vmatpush1.msra.mxu0 0.0
        %790 = vmatprep.subr.mxu0 0.0
        %791 = vmatpush1.msra.mxu0 0.0
        %792 = vmatprep.subr.mxu0 0.0
        %793 = vmatpush1.msra.mxu0 0.0
        %794 = vmatprep.subr.mxu0 0.0
        %795 = vmatpush1.msra.mxu0 0.0
        %796 = vmatprep.subr.mxu0 0.0
        %797 = vmatpush1.msra.mxu0 0.0
        %798 = vmatprep.subr.mxu0 0.0
        %799 = vmatpush1.msra.mxu0 0.0
        %800 = vmatprep.subr.mxu0 0.0
        %801 = vmatpush1.msra.mxu0 0.0
        %802 = vmatprep.subr.mxu0 0.0
        %803 = vmatpush1.msra.mxu0 0.0
        %804 = vmatprep.subr.mxu0 0.0
        %805 = vmatpush1.msra.mxu0 0.0
        %806 = vmatprep.subr.mxu0 0.0
        %807 = vmatpush1.msra.mxu0 0.0
        %808 = vmatprep.subr.mxu0 0.0
        %809 = vmatpush1.msra.mxu0 0.0
        %810 = vmatprep.mubr.f32.mxu0 0.0
        %v811 = vand.u32 %v248, 4294901760
        %v812 = vsub.f32 %v248, %v811
        %v813 = vand.u32 %v812, 4294901760
        %814 = vmatmul.mubr.f32.gmra.mrb[0].mxu0 %v813
        %v815 = vpop.f32.mrb[0].mxu0
        %v816 = vadd.f32 %v678, %v815
        %v817 = vpop.f32.mrb[0].mxu0
        %v818 = vadd.f32 %v680, %v817
        %819 = vmatprep.mubr.f32.mxu0 0.0
        %v820 = vand.u32 %v251, 4294901760
        %v821 = vsub.f32 %v251, %v820
        %v822 = vand.u32 %v821, 4294901760
        %823 = vmatmul.mubr.f32.gmra.mrb[0].mxu0 %v822
        %v824 = vpop.f32.mrb[0].mxu0
        %v825 = vadd.f32 %v686, %v824
        %v826 = vpop.f32.mrb[0].mxu0
        %v827 = vadd.f32 %v688, %v826
        %828 = vmatprep.mubr.f32.mxu0 0.0
        %v829 = vand.u32 %v254, 4294901760
        %v830 = vsub.f32 %v254, %v829
        %v831 = vand.u32 %v830, 4294901760
        %832 = vmatmul.mubr.f32.gmra.mrb[0].mxu0 %v831
        %v833 = vpop.f32.mrb[0].mxu0
        %v834 = vadd.f32 %v694, %v833
        %v835 = vpop.f32.mrb[0].mxu0
        %v836 = vadd.f32 %v696, %v835
        %837 = vmatprep.mubr.f32.mxu0 0.0
        %v838 = vand.u32 %v257, 4294901760
        %v839 = vsub.f32 %v257, %v838
        %v840 = vand.u32 %v839, 4294901760
        %841 = vmatmul.mubr.f32.gmra.mrb[0].mxu0 %v840
        %v842 = vpop.f32.mrb[0].mxu0
        %v843 = vadd.f32 %v702, %v842
        %v844 = vpop.f32.mrb[0].mxu0
        %v845 = vadd.f32 %v704, %v844
        %846 = vmatprep.mubr.f32.mxu0 0.0
        %v847 = vand.u32 %v260, 4294901760
        %v848 = vsub.f32 %v260, %v847
        %v849 = vand.u32 %v848, 4294901760
        %850 = vmatmul.mubr.f32.gmra.mrb[0].mxu0 %v849
        %v851 = vpop.f32.mrb[0].mxu0
        %v852 = vadd.f32 %v710, %v851
        %v853 = vpop.f32.mrb[0].mxu0
        %v854 = vadd.f32 %v712, %v853
        %855 = vmatprep.mubr.f32.mxu0 0.0
        %v856 = vand.u32 %v263, 4294901760
        %v857 = vsub.f32 %v263, %v856
        %v858 = vand.u32 %v857, 4294901760
        %859 = vmatmul.mubr.f32.gmra.mrb[0].mxu0 %v858
        %v860 = vpop.f32.mrb[0].mxu0
        %v861 = vadd.f32 %v718, %v860
        %v862 = vpop.f32.mrb[0].mxu0
        %v863 = vadd.f32 %v720, %v862
        %864 = vmatprep.mubr.f32.mxu0 0.0
        %v865 = vand.u32 %v266, 4294901760
        %v866 = vsub.f32 %v266, %v865
        %v867 = vand.u32 %v866, 4294901760
        %868 = vmatmul.mubr.f32.gmra.mrb[0].mxu0 %v867
        %v869 = vpop.f32.mrb[0].mxu0
        %v870 = vadd.f32 %v726, %v869
        %v871 = vpop.f32.mrb[0].mxu0
        %v872 = vadd.f32 %v728, %v871
        %873 = vmatprep.mubr.f32.mxu0 0.0
        %v874 = vand.u32 %v269, 4294901760
        %v875 = vsub.f32 %v269, %v874
        %v876 = vand.u32 %v875, 4294901760
        %877 = vmatmul.mubr.f32.gmra.mrb[0].mxu0 %v876
        %v878 = vpop.f32.mrb[0].mxu0
        %v879 = vadd.f32 %v734, %v878
        %v880 = vpop.f32.mrb[0].mxu0
        %v881 = vadd.f32 %v736, %v880
        %882 = vdwg.mxu0
        %v883 = vand.u32 %v233, 4294901760
        %v884 = vsub.f32 %v233, %v883
        %v885 = vand.u32 %v884, 4294901760
        %886 = vmatprep.subr.mxu0 %v885
        %v887 = vand.u32 %v231, 4294901760
        %v888 = vsub.f32 %v231, %v887
        %v889 = vand.u32 %v888, 4294901760
        %890 = vmatpush1.msra.mxu0 %v889
        %v891 = vand.u32 %v237, 4294901760
        %v892 = vsub.f32 %v237, %v891
        %v893 = vand.u32 %v892, 4294901760
        %894 = vmatprep.subr.mxu0 %v893
        %v895 = vand.u32 %v235, 4294901760
        %v896 = vsub.f32 %v235, %v895
        %v897 = vand.u32 %v896, 4294901760
        %898 = vmatpush1.msra.mxu0 %v897
        %v899 = vand.u32 %v241, 4294901760
        %v900 = vsub.f32 %v241, %v899
        %v901 = vand.u32 %v900, 4294901760
        %902 = vmatprep.subr.mxu0 %v901
        %v903 = vand.u32 %v239, 4294901760
        %v904 = vsub.f32 %v239, %v903
        %v905 = vand.u32 %v904, 4294901760
        %906 = vmatpush1.msra.mxu0 %v905
        %v907 = vand.u32 %v245, 4294901760
        %v908 = vsub.f32 %v245, %v907
        %v909 = vand.u32 %v908, 4294901760
        %910 = vmatprep.subr.mxu0 %v909
        %v911 = vand.u32 %v243, 4294901760
        %v912 = vsub.f32 %v243, %v911
        %v913 = vand.u32 %v912, 4294901760
        %914 = vmatpush1.msra.mxu0 %v913
        %915 = vmatprep.subr.mxu0 0.0
        %916 = vmatpush1.msra.mxu0 0.0
        %917 = vmatprep.subr.mxu0 0.0
        %918 = vmatpush1.msra.mxu0 0.0
        %919 = vmatprep.subr.mxu0 0.0
        %920 = vmatpush1.msra.mxu0 0.0
        %921 = vmatprep.subr.mxu0 0.0
        %922 = vmatpush1.msra.mxu0 0.0
        %923 = vmatprep.subr.mxu0 0.0
        %924 = vmatpush1.msra.mxu0 0.0
        %925 = vmatprep.subr.mxu0 0.0
        %926 = vmatpush1.msra.mxu0 0.0
        %927 = vmatprep.subr.mxu0 0.0
        %928 = vmatpush1.msra.mxu0 0.0
        %929 = vmatprep.subr.mxu0 0.0
        %930 = vmatpush1.msra.mxu0 0.0
        %931 = vmatprep.subr.mxu0 0.0
        %932 = vmatpush1.msra.mxu0 0.0
        %933 = vmatprep.subr.mxu0 0.0
        %934 = vmatpush1.msra.mxu0 0.0
        %935 = vmatprep.subr.mxu0 0.0
        %936 = vmatpush1.msra.mxu0 0.0
        %937 = vmatprep.subr.mxu0 0.0
        %938 = vmatpush1.msra.mxu0 0.0
        %939 = vmatprep.subr.mxu0 0.0
        %940 = vmatpush1.msra.mxu0 0.0
        %941 = vmatprep.subr.mxu0 0.0
        %942 = vmatpush1.msra.mxu0 0.0
        %943 = vmatprep.subr.mxu0 0.0
        %944 = vmatpush1.msra.mxu0 0.0
        %945 = vmatprep.subr.mxu0 0.0
        %946 = vmatpush1.msra.mxu0 0.0
        %947 = vmatprep.subr.mxu0 0.0
        %948 = vmatpush1.msra.mxu0 0.0
        %949 = vmatprep.subr.mxu0 0.0
        %950 = vmatpush1.msra.mxu0 0.0
        %951 = vmatprep.subr.mxu0 0.0
        %952 = vmatpush1.msra.mxu0 0.0
        %953 = vmatprep.subr.mxu0 0.0
        %954 = vmatpush1.msra.mxu0 0.0
        %955 = vmatprep.subr.mxu0 0.0
        %956 = vmatpush1.msra.mxu0 0.0
        %957 = vmatprep.subr.mxu0 0.0
        %958 = vmatpush1.msra.mxu0 0.0
        %959 = vmatprep.subr.mxu0 0.0
        %960 = vmatpush1.msra.mxu0 0.0
        %961 = vmatprep.subr.mxu0 0.0
        %962 = vmatpush1.msra.mxu0 0.0
        %963 = vmatprep.subr.mxu0 0.0
        %964 = vmatpush1.msra.mxu0 0.0
        %965 = vmatprep.subr.mxu0 0.0
        %966 = vmatpush1.msra.mxu0 0.0
        %967 = vmatprep.subr.mxu0 0.0
        %968 = vmatpush1.msra.mxu0 0.0
        %969 = vmatprep.subr.mxu0 0.0
        %970 = vmatpush1.msra.mxu0 0.0
        %971 = vmatprep.mubr.f32.mxu0 0.0
        %v972 = vand.u32 %v248, 4294901760
        %973 = vmatmul.mubr.f32.gmra.mrb[0].mxu0 %v972
        %v974 = vpop.f32.mrb[0].mxu0
        %v975 = vadd.f32 %v816, %v974
        %v976 = vpop.f32.mrb[0].mxu0
        %v977 = vadd.f32 %v818, %v976
        %978 = vmatprep.mubr.f32.mxu0 0.0
        %v979 = vand.u32 %v251, 4294901760
        %980 = vmatmul.mubr.f32.gmra.mrb[0].mxu0 %v979
        %v981 = vpop.f32.mrb[0].mxu0
        %v982 = vadd.f32 %v825, %v981
        %v983 = vpop.f32.mrb[0].mxu0
        %v984 = vadd.f32 %v827, %v983
        %985 = vmatprep.mubr.f32.mxu0 0.0
        %v986 = vand.u32 %v254, 4294901760
        %987 = vmatmul.mubr.f32.gmra.mrb[0].mxu0 %v986
        %v988 = vpop.f32.mrb[0].mxu0
        %v989 = vadd.f32 %v834, %v988
        %v990 = vpop.f32.mrb[0].mxu0
        %v991 = vadd.f32 %v836, %v990
        %992 = vmatprep.mubr.f32.mxu0 0.0
        %v993 = vand.u32 %v257, 4294901760
        %994 = vmatmul.mubr.f32.gmra.mrb[0].mxu0 %v993
        %v995 = vpop.f32.mrb[0].mxu0
        %v996 = vadd.f32 %v843, %v995
        %v997 = vpop.f32.mrb[0].mxu0
        %v998 = vadd.f32 %v845, %v997
        %999 = vmatprep.mubr.f32.mxu0 0.0
        %v1000 = vand.u32 %v260, 4294901760
        %1001 = vmatmul.mubr.f32.gmra.mrb[0].mxu0 %v1000
        %v1002 = vpop.f32.mrb[0].mxu0
        %v1003 = vadd.f32 %v852, %v1002
        %v1004 = vpop.f32.mrb[0].mxu0
        %v1005 = vadd.f32 %v854, %v1004
        %1006 = vmatprep.mubr.f32.mxu0 0.0
        %v1007 = vand.u32 %v263, 4294901760
        %1008 = vmatmul.mubr.f32.gmra.mrb[0].mxu0 %v1007
        %v1009 = vpop.f32.mrb[0].mxu0
        %v1010 = vadd.f32 %v861, %v1009
        %v1011 = vpop.f32.mrb[0].mxu0
        %v1012 = vadd.f32 %v863, %v1011
        %1013 = vmatprep.mubr.f32.mxu0 0.0
        %v1014 = vand.u32 %v266, 4294901760
        %1015 = vmatmul.mubr.f32.gmra.mrb[0].mxu0 %v1014
        %v1016 = vpop.f32.mrb[0].mxu0
        %v1017 = vadd.f32 %v870, %v1016
        %v1018 = vpop.f32.mrb[0].mxu0
        %v1019 = vadd.f32 %v872, %v1018
        %1020 = vmatprep.mubr.f32.mxu0 0.0
        %v1021 = vand.u32 %v269, 4294901760
        %1022 = vmatmul.mubr.f32.gmra.mrb[0].mxu0 %v1021
        %v1023 = vpop.f32.mrb[0].mxu0
        %v1024 = vadd.f32 %v879, %v1023
        %v1025 = vpop.f32.mrb[0].mxu0
        %v1026 = vadd.f32 %v881, %v1025
        %1027 = vdwg.mxu0
        %v1028 = vand.u32 %v233, 4294901760
        %1029 = vmatprep.subr.mxu0 %v1028
        %v1030 = vand.u32 %v231, 4294901760
        %1031 = vmatpush1.msra.mxu0 %v1030
        %v1032 = vand.u32 %v237, 4294901760
        %1033 = vmatprep.subr.mxu0 %v1032
        %v1034 = vand.u32 %v235, 4294901760
        %1035 = vmatpush1.msra.mxu0 %v1034
        %v1036 = vand.u32 %v241, 4294901760
        %1037 = vmatprep.subr.mxu0 %v1036
        %v1038 = vand.u32 %v239, 4294901760
        %1039 = vmatpush1.msra.mxu0 %v1038
        %v1040 = vand.u32 %v245, 4294901760
        %1041 = vmatprep.subr.mxu0 %v1040
        %v1042 = vand.u32 %v243, 4294901760
        %1043 = vmatpush1.msra.mxu0 %v1042
        %1044 = vmatprep.subr.mxu0 0.0
        %1045 = vmatpush1.msra.mxu0 0.0
        %1046 = vmatprep.subr.mxu0 0.0
        %1047 = vmatpush1.msra.mxu0 0.0
        %1048 = vmatprep.subr.mxu0 0.0
        %1049 = vmatpush1.msra.mxu0 0.0
        %1050 = vmatprep.subr.mxu0 0.0
        %1051 = vmatpush1.msra.mxu0 0.0
        %1052 = vmatprep.subr.mxu0 0.0
        %1053 = vmatpush1.msra.mxu0 0.0
        %1054 = vmatprep.subr.mxu0 0.0
        %1055 = vmatpush1.msra.mxu0 0.0
        %1056 = vmatprep.subr.mxu0 0.0
        %1057 = vmatpush1.msra.mxu0 0.0
        %1058 = vmatprep.subr.mxu0 0.0
        %1059 = vmatpush1.msra.mxu0 0.0
        %1060 = vmatprep.subr.mxu0 0.0
        %1061 = vmatpush1.msra.mxu0 0.0
        %1062 = vmatprep.subr.mxu0 0.0
        %1063 = vmatpush1.msra.mxu0 0.0
        %1064 = vmatprep.subr.mxu0 0.0
        %1065 = vmatpush1.msra.mxu0 0.0
        %1066 = vmatprep.subr.mxu0 0.0
        %1067 = vmatpush1.msra.mxu0 0.0
        %1068 = vmatprep.subr.mxu0 0.0
        %1069 = vmatpush1.msra.mxu0 0.0
        %1070 = vmatprep.subr.mxu0 0.0
        %1071 = vmatpush1.msra.mxu0 0.0
        %1072 = vmatprep.subr.mxu0 0.0
        %1073 = vmatpush1.msra.mxu0 0.0
        %1074 = vmatprep.subr.mxu0 0.0
        %1075 = vmatpush1.msra.mxu0 0.0
        %1076 = vmatprep.subr.mxu0 0.0
        %1077 = vmatpush1.msra.mxu0 0.0
        %1078 = vmatprep.subr.mxu0 0.0
        %1079 = vmatpush1.msra.mxu0 0.0
        %1080 = vmatprep.subr.mxu0 0.0
        %1081 = vmatpush1.msra.mxu0 0.0
        %1082 = vmatprep.subr.mxu0 0.0
        %1083 = vmatpush1.msra.mxu0 0.0
        %1084 = vmatprep.subr.mxu0 0.0
        %1085 = vmatpush1.msra.mxu0 0.0
        %1086 = vmatprep.subr.mxu0 0.0
        %1087 = vmatpush1.msra.mxu0 0.0
        %1088 = vmatprep.subr.mxu0 0.0
        %1089 = vmatpush1.msra.mxu0 0.0
        %1090 = vmatprep.subr.mxu0 0.0
        %1091 = vmatpush1.msra.mxu0 0.0
        %1092 = vmatprep.subr.mxu0 0.0
        %1093 = vmatpush1.msra.mxu0 0.0
        %1094 = vmatprep.subr.mxu0 0.0
        %1095 = vmatpush1.msra.mxu0 0.0
        %1096 = vmatprep.subr.mxu0 0.0
        %1097 = vmatpush1.msra.mxu0 0.0
        %1098 = vmatprep.subr.mxu0 0.0
        %1099 = vmatpush1.msra.mxu0 0.0
        %1100 = vmatprep.mubr.f32.mxu0 0.0
        %v1101 = vand.u32 %v248, 4294901760
        %1102 = vmatmul.mubr.f32.gmra.mrb[0].mxu0 %v1101
        %v1103 = vpop.f32.mrb[0].mxu0
        %v1104 = vadd.f32 %v975, %v1103
        %v1105 = vpop.f32.mrb[0].mxu0
        %v1106 = vadd.f32 %v977, %v1105
        %1107 = vmatprep.mubr.f32.mxu0 0.0
        %v1108 = vand.u32 %v251, 4294901760
        %1109 = vmatmul.mubr.f32.gmra.mrb[0].mxu0 %v1108
        %v1110 = vpop.f32.mrb[0].mxu0
        %v1111 = vadd.f32 %v982, %v1110
        %v1112 = vpop.f32.mrb[0].mxu0
        %v1113 = vadd.f32 %v984, %v1112
        %1114 = vmatprep.mubr.f32.mxu0 0.0
        %v1115 = vand.u32 %v254, 4294901760
        %1116 = vmatmul.mubr.f32.gmra.mrb[0].mxu0 %v1115
        %v1117 = vpop.f32.mrb[0].mxu0
        %v1118 = vadd.f32 %v989, %v1117
        %v1119 = vpop.f32.mrb[0].mxu0
        %v1120 = vadd.f32 %v991, %v1119
        %1121 = vmatprep.mubr.f32.mxu0 0.0
        %v1122 = vand.u32 %v257, 4294901760
        %1123 = vmatmul.mubr.f32.gmra.mrb[0].mxu0 %v1122
        %v1124 = vpop.f32.mrb[0].mxu0
        %v1125 = vadd.f32 %v996, %v1124
        %v1126 = vpop.f32.mrb[0].mxu0
        %v1127 = vadd.f32 %v998, %v1126
        %1128 = vmatprep.mubr.f32.mxu0 0.0
        %v1129 = vand.u32 %v260, 4294901760
        %1130 = vmatmul.mubr.f32.gmra.mrb[0].mxu0 %v1129
        %v1131 = vpop.f32.mrb[0].mxu0
        %v1132 = vadd.f32 %v1003, %v1131
        %v1133 = vpop.f32.mrb[0].mxu0
        %v1134 = vadd.f32 %v1005, %v1133
        %1135 = vmatprep.mubr.f32.mxu0 0.0
        %v1136 = vand.u32 %v263, 4294901760
        %1137 = vmatmul.mubr.f32.gmra.mrb[0].mxu0 %v1136
        %v1138 = vpop.f32.mrb[0].mxu0
        %v1139 = vadd.f32 %v1010, %v1138
        %v1140 = vpop.f32.mrb[0].mxu0
        %v1141 = vadd.f32 %v1012, %v1140
        %1142 = vmatprep.mubr.f32.mxu0 0.0
        %v1143 = vand.u32 %v266, 4294901760
        %1144 = vmatmul.mubr.f32.gmra.mrb[0].mxu0 %v1143
        %v1145 = vpop.f32.mrb[0].mxu0
        %v1146 = vadd.f32 %v1017, %v1145
        %v1147 = vpop.f32.mrb[0].mxu0
        %v1148 = vadd.f32 %v1019, %v1147
        %1149 = vmatprep.mubr.f32.mxu0 0.0
        %v1150 = vand.u32 %v269, 4294901760
        %1151 = vmatmul.mubr.f32.gmra.mrb[0].mxu0 %v1150
        %v1152 = vpop.f32.mrb[0].mxu0
        %v1153 = vadd.f32 %v1024, %v1152
        %v1154 = vpop.f32.mrb[0].mxu0
        %v1155 = vadd.f32 %v1026, %v1154
        %1156 = vdwg.mxu0
        %1157 = vst [vmem:[%s167] sm:$0xff] %v1104
        %1158 = vst [vmem:[%s167 + $0x8] sm:$0xff] %v1106
        %1159 = vst [vmem:[%s167 + $0x10] sm:$0xff] %v1111
        %1160 = vst [vmem:[%s167 + $0x18] sm:$0xff] %v1113
        %1161 = vst [vmem:[%s167 + $0x20] sm:$0xff] %v1118
        %1162 = vst [vmem:[%s167 + $0x28] sm:$0xff] %v1120
        %1163 = vst [vmem:[%s167 + $0x30] sm:$0xff] %v1125
        %1164 = vst [vmem:[%s167 + $0x38] sm:$0xff] %v1127
        %1165 = vst [vmem:[%s167 + $0x40] sm:$0xff] %v1132
        %1166 = vst [vmem:[%s167 + $0x48] sm:$0xff] %v1134
        %1167 = vst [vmem:[%s167 + $0x50] sm:$0xff] %v1139
        %1168 = vst [vmem:[%s167 + $0x58] sm:$0xff] %v1141
        %1169 = vst [vmem:[%s167 + $0x60] sm:$0xff] %v1146
        %1170 = vst [vmem:[%s167 + $0x68] sm:$0xff] %v1148
        %1171 = vst [vmem:[%s167 + $0x70] sm:$0xff] %v1153
        %1172 = vst [vmem:[%s167 + $0x78] sm:$0xff] %v1155
        %s1173 = sand.u32 %s90, 1
        %s1174 = scalar_lea.sflag [#allocation3], %s1173
        %s1175 = sand.u32 %s90, 1
        %s1176 = smul.addr %s1175, 128
        %s1177 = scalar_lea.vmem [#allocation2], %s1176
        // Predicated region
        $region29: #{spotlight_forward.2} parent=27 // pred_check
          %p1178 = pneg %p100
        $region30: #{spotlight_forward.2} parent=27 // pred_check_branch
          %1180 = sbr.rel (%p1178) target = $region32
        $region31: #{spotlight_forward.2} parent=27 // pred_region
          %s1181 = smul.u32 8, %s21
          %s1182 = smul.u32 2, %s20
          %s1184 = ssub.s32 2048, 2048
          %1185 = vsyncadd %s1174, %s1184
          %s1186 = smul.addr %s1181, 2
          %s1187 = sadd.s32 %s1182, %s1186
          %s1188 = smul.addr %s1187, 128
          %s1189 = scalar_lea.hbm %s2, %s1188
          %s1190 = sshll.u32 %s1177, 4
          %s1191 = int_to_ptr.vmem [resolvable:$true] %s1190
          %1196 = dma.vmem_to_hbm [thread:$0]  %s1191, 2048, %s1189, %s1174, 256, 256, 16
        $region32: #{spotlight_forward.2} parent=27 // pred_fallthru
          _
      $region28: #{spotlight_forward.2} parent=5 // pred_fallthru
        _
      %p1197 = scmp.le.s32.totalorder 2, %s11
      // Predicated region
      $region33: #{spotlight_forward.2} parent=5 // pred_check
        %p1198 = pneg %p1197
      $region34: #{spotlight_forward.2} parent=5 // pred_check_branch
        %1200 = sbr.rel (%p1198) target = $region36
      $region35: #{spotlight_forward.2} parent=5 // pred_region
        %s1201 = ssub.s32 %s11, 2
        // Predicated region
        $region37: #{spotlight_forward.2} parent=35 // pred_check
          %p1202 = pneg %p106
        $region38: #{spotlight_forward.2} parent=35 // pred_check_branch
          %1204 = sbr.rel (%p1202) target = $region40
        $region39: #{spotlight_forward.2} parent=35 // pred_region
          %s1205 = sand.u32 %s91, 1
          %s1206 = scalar_lea.sflag [#allocation3], %s1205
          %s1207 = sand.u32 %s91, 1
          %s1208 = smul.addr %s1207, 128
          %s1209 = scalar_lea.vmem [#allocation2], %s1208
          %1210 = dma.done %s1206, 2048
        $region40: #{spotlight_forward.2} parent=35 // pred_fallthru
          _
      $region36: #{spotlight_forward.2} parent=5 // pred_fallthru
        _
    $region6: #{spotlight_forward.2} parent=1 // loop_footer
      %s15 = sadd.s32 1, %s11
    $region7: #{spotlight_forward.2} parent=1 // loop_footer_branch
      %10 = sbr.rel target = $region3
    $region8: #{spotlight_forward.2} parent=1 // loop_exit
      _
    %1211 = vsyncpa [#allocation3], 1
    %s1212 = scalar_lea.sflag [#allocation3], 1
    %1213 = vsyncpa %s1212, 1

</llo_original>
